<compile_context>
chip_gen: v5e
topology: v5e:2x2
jax: 0.10.0
libtpu: 0.0.40
codegen_flags: <defaults>
</compile_context>

<pallas_src>
import numpy as np
import jax
import jax.numpy as jnp
from jax import lax
from jax.experimental import pallas as pl
from jax.experimental.pallas import tpu as pltpu

INPUT_SIZE = 1
HIDDEN_SIZE = 50        # logical hidden size (matches nn.LSTM)
HIDDEN_PAD = 64         # lane-aligned padded hidden size used inside the kernel
OUT_PAD = 128           # lane-padded output width (sliced back to 1 in wrapper)
NUM_LAYERS = 2          # hard-wired as two skew-fused layers below


# ----------------------------------------------------------------------------
# Kernel
# ----------------------------------------------------------------------------
def _lstm_kernel(x_ref,       # (T+1, B, 1) time-major input, extra zero step
                 w_comb_ref,  # (2Hp, 8Hp)  fused [[wh0, wx1], [0, wh1]]
                 wx0c_ref,    # (1, 8Hp)    layer-0 input weight in fused cols
                 bc_ref,      # (1, 8Hp)    fused biases (b0 | b1 per gate)
                 wfc_ref,     # (1, Hp)
                 bfc_ref,     # (1, 1)
                 out_ref):    # (B, OUT_PAD)
    Tp1, B, _ = x_ref.shape
    T = Tp1 - 1
    Hp = wfc_ref.shape[1]
    H2 = 2 * Hp

    # Fused state: lanes [0:Hp] = layer 0 (h0 / c0), lanes [Hp:2Hp] = layer 1.
    h01 = jnp.zeros((B, H2), jnp.float32)
    c01 = jnp.zeros((B, H2), jnp.float32)

    # Wave w computes layer-0 step w and layer-1 step w-1 from the same state:
    # gates = x[w]*wx0c + bc + [h0 | h1] @ W_comb.  T+1 waves total; the first
    # wave has no valid layer-1 step, the last wave no valid layer-0 step.
    # Statically unrolled: T is small and known at trace time.
    for w in range(T + 1):
        # Per-wave additive term (pure VPU, slack slots -> kept in-loop).
        xadd = x_ref[w] * wx0c_ref[...] + bc_ref[...]                  # (B, 8Hp)
        # Single MXU push per wave, fed directly from the VMEM ref.
        gates = xadd + jnp.dot(h01, w_comb_ref[...],
                               preferred_element_type=jnp.float32)     # (B, 8Hp)

        # Column layout: [i | f | o | g], each 2Hp wide ([layer0 | layer1]).
        sig = jax.nn.sigmoid(gates[:, :3 * H2])   # one EUP op over (B, 6Hp)
        i = sig[:, 0 * H2:1 * H2]
        f = sig[:, 1 * H2:2 * H2]
        o = sig[:, 2 * H2:3 * H2]
        g = jnp.tanh(gates[:, 3 * H2:4 * H2])     # one EUP op over (B, 2Hp)

        c_new = f * c01 + i * g                   # both layers at once
        h_new = o * jnp.tanh(c_new)               # one EUP op over (B, 2Hp)

        if w == 0:
            # First wave: layer-1 has no valid step yet; keep its lanes at 0.
            lane = lax.broadcasted_iota(jnp.int32, (B, H2), 1)
            l0 = lane < Hp
            h01 = jnp.where(l0, h_new, h01)
            c01 = jnp.where(l0, c_new, c01)
        else:
            # Middle waves update both layers.  On the last wave the layer-0
            # half of h_new/c_new is a spurious "step T" that is never read
            # (only h1 = h01[:, Hp:] feeds the FC head), so no masking needed.
            h01, c01 = h_new, c_new

    # Final Linear(H, 1): VPU multiply + lane reduction instead of an N=1 MXU
    # push; write a lane-dense (B, 128) block, sliced back to (B, 1) outside.
    h1 = h01[:, Hp:]
    y = jnp.sum(h1 * wfc_ref[...], axis=-1, keepdims=True) + bfc_ref[...]
    out_ref[...] = jnp.broadcast_to(y, out_ref.shape)


# ----------------------------------------------------------------------------
# Wrapper
# ----------------------------------------------------------------------------
def lstm_model_forward(x, packed):
    """x: (B, T, 1) float32 -> (B, 1) float32."""
    B, T, _ = x.shape
    x_tm = jnp.transpose(x, (1, 0, 2))                    # time-major (T, B, 1)
    x_tm = jnp.pad(x_tm, ((0, 1), (0, 0), (0, 0)))        # extra zero step for the final wave

    args = (
        x_tm,
        packed["w_comb"], packed["wx0c"], packed["bc"],
        packed["wfc"], packed["bfc"],
    )
    vmem = pl.BlockSpec(memory_space=pltpu.MemorySpace.VMEM)
    out_padded = pl.pallas_call(
        _lstm_kernel,
        out_shape=jax.ShapeDtypeStruct((B, OUT_PAD), jnp.float32),
        in_specs=[vmem] * len(args),
        out_specs=vmem,
    )(*args)
    return out_padded[:, :1]
    # TODO(synk): for large serving batches, first grow B inside this single
    # call (MXU push latency is ~independent of M up to the MXU height); only
    # add a "parallel" batch grid axis for the 2 TensorCores on v7x beyond that.


# ----------------------------------------------------------------------------
# Parameter handling (PyTorch-layout params -> fused/padded kernel layout)
# ----------------------------------------------------------------------------
def init_params(key, input_size=INPUT_SIZE, hidden_size=HIDDEN_SIZE):
    """PyTorch-layout params, mirroring nn.LSTM / nn.Linear init shapes."""
    H = hidden_size
    k = 1.0 / np.sqrt(H)
    keys = jax.random.split(key, 10)

    def u(kk, shape):
        return jax.random.uniform(kk, shape, jnp.float32, minval=-k, maxval=k)

    return {
        "w_ih0": u(keys[0], (4 * H, input_size)),
        "w_hh0": u(keys[1], (4 * H, H)),
        "b_ih0": u(keys[2], (4 * H,)),
        "b_hh0": u(keys[3], (4 * H,)),
        "w_ih1": u(keys[4], (4 * H, H)),
        "w_hh1": u(keys[5], (4 * H, H)),
        "b_ih1": u(keys[6], (4 * H,)),
        "b_hh1": u(keys[7], (4 * H,)),
        "w_fc":  u(keys[8], (1, H)),
        "b_fc":  u(keys[9], (1,)),
    }


def _split_gates(w_t, H):
    """Split (..., 4H) (PyTorch gate order i,f,g,o) into the 4 gate blocks."""
    return (w_t[..., 0 * H:1 * H], w_t[..., 1 * H:2 * H],
            w_t[..., 2 * H:3 * H], w_t[..., 3 * H:4 * H])


def pack_params(p, H=HIDDEN_SIZE, Hp=HIDDEN_PAD):
    """Transpose, zero-pad to Hp, fold biases, and build the fused wave layout.

    Fused gate-column layout (8Hp wide): [i0 i1 | f0 f1 | o0 o1 | g0 g1],
    each sub-block Hp wide.  Rows of w_comb: [h0 (Hp); h1 (Hp)].
    """
    def padc(w):                      # pad gate-block columns H -> Hp
        return jnp.pad(w, ((0, 0), (0, Hp - H)))

    def padr(w):                      # pad rows H -> Hp
        return jnp.pad(w, ((0, Hp - w.shape[0]), (0, 0)))

    # layer 0
    wi0x, wf0x, wg0x, wo0x = [padc(g) for g in _split_gates(p["w_ih0"].T, H)]        # (1, Hp)
    wi0h, wf0h, wg0h, wo0h = [padr(padc(g)) for g in _split_gates(p["w_hh0"].T, H)]  # (Hp, Hp)
    b0i, b0f, b0g, b0o = [padc(g) for g in
                          _split_gates((p["b_ih0"] + p["b_hh0"])[None, :], H)]       # (1, Hp)
    # layer 1 (its "input" is h0)
    wi1x, wf1x, wg1x, wo1x = [padr(padc(g)) for g in _split_gates(p["w_ih1"].T, H)]  # (Hp, Hp)
    wi1h, wf1h, wg1h, wo1h = [padr(padc(g)) for g in _split_gates(p["w_hh1"].T, H)]  # (Hp, Hp)
    b1i, b1f, b1g, b1o = [padc(g) for g in
                          _split_gates((p["b_ih1"] + p["b_hh1"])[None, :], H)]       # (1, Hp)

    z = jnp.zeros((Hp, Hp), jnp.float32)
    # w_comb = [[wh0, wx1], [0, wh1]] interleaved per gate, sigmoid gates first.
    top = jnp.concatenate([wi0h, wi1x, wf0h, wf1x, wo0h, wo1x, wg0h, wg1x], axis=1)  # (Hp, 8Hp)
    bot = jnp.concatenate([z,    wi1h, z,    wf1h, z,    wo1h, z,    wg1h], axis=1)  # (Hp, 8Hp)
    w_comb = jnp.concatenate([top, bot], axis=0)                                     # (2Hp, 8Hp)

    zl = jnp.zeros((1, Hp), jnp.float32)
    wx0c = jnp.concatenate([wi0x, zl, wf0x, zl, wo0x, zl, wg0x, zl], axis=1)         # (1, 8Hp)
    bc = jnp.concatenate([b0i, b1i, b0f, b1f, b0o, b1o, b0g, b1g], axis=1)           # (1, 8Hp)

    wfc = jnp.pad(p["w_fc"], ((0, 0), (0, Hp - H)))                                  # (1, Hp)
    bfc = p["b_fc"][None, :]                                                         # (1, 1)
    return {"w_comb": w_comb, "wx0c": wx0c, "bc": bc, "wfc": wfc, "bfc": bfc}


# ----------------------------------------------------------------------------
# Pure-JAX reference (unpadded, PyTorch-layout weights) for correctness check
# ----------------------------------------------------------------------------
def reference_forward(x, p):
    B, T, _ = x.shape
    H = HIDDEN_SIZE

    def cell(gates, c):
        i = jax.nn.sigmoid(gates[:, 0 * H:1 * H])
        f = jax.nn.sigmoid(gates[:, 1 * H:2 * H])
        g = jnp.tanh(gates[:, 2 * H:3 * H])
        o = jax.nn.sigmoid(gates[:, 3 * H:4 * H])
        c = f * c + i * g
        return o * jnp.tanh(c), c

    h0 = c0 = h1 = c1 = jnp.zeros((B, H), jnp.float32)
    for t in range(T):
        xt = x[:, t, :]
        g0 = xt @ p["w_ih0"].T + h0 @ p["w_hh0"].T + p["b_ih0"] + p["b_hh0"]
        h0, c0 = cell(g0, c0)
        g1 = h0 @ p["w_ih1"].T + h1 @ p["w_hh1"].T + p["b_ih1"] + p["b_hh1"]
        h1, c1 = cell(g1, c1)
    return h1 @ p["w_fc"].T + p["b_fc"]


if __name__ == "__main__":
    key = jax.random.PRNGKey(0)
    k_param, k_x = jax.random.split(key)

    B, T = 2, 8
    x = jax.random.normal(k_x, (B, T, INPUT_SIZE), jnp.float32)
    params = init_params(k_param)
    packed = pack_params(params)

    out = lstm_model_forward(x, packed)
    out = jax.block_until_ready(out)

    ref = reference_forward(x, params)
    assert out.shape == (B, 1)
    np.testing.assert_allclose(np.asarray(out), np.asarray(ref),
                               rtol=1e-4, atol=1e-5)
    print("KERNEL_OK")
</pallas_src>

<mosaic_0001>
module attributes {stable_mosaic.version = 11 : i64} {
  func.func @_lstm_kernel(%arg0: memref<9x2x1xf32, #tpu.memory_space<vmem>>, %arg1: memref<128x512xf32, #tpu.memory_space<vmem>>, %arg2: memref<1x512xf32, #tpu.memory_space<vmem>>, %arg3: memref<1x512xf32, #tpu.memory_space<vmem>>, %arg4: memref<1x64xf32, #tpu.memory_space<vmem>>, %arg5: memref<1x1xf32, #tpu.memory_space<vmem>>, %arg6: memref<2x128xf32, #tpu.memory_space<vmem>>) attributes {dimension_semantics = [], scalar_prefetch = 0 : i64, scratch_operands = 0 : i64, tpu.core_type = #tpu.core_type<tc>} {
    %cst = arith.constant 0.000000e+00 : f32
    %0 = vector.broadcast %cst : f32 to vector<2x128xf32>
    %cst_0 = arith.constant 0.000000e+00 : f32
    %1 = vector.broadcast %cst_0 : f32 to vector<2x128xf32>
    %c0 = arith.constant 0 : index
    %c0_1 = arith.constant 0 : index
    %c0_2 = arith.constant 0 : index
    %2 = vector.load %arg0[%c0, %c0_1, %c0_2] : memref<9x2x1xf32, #tpu.memory_space<vmem>>, vector<1x2x1xf32>
    %3 = vector.shape_cast %2 : vector<1x2x1xf32> to vector<2x1xf32>
    %c0_3 = arith.constant 0 : index
    %c0_4 = arith.constant 0 : index
    %4 = vector.load %arg2[%c0_3, %c0_4] : memref<1x512xf32, #tpu.memory_space<vmem>>, vector<1x512xf32>
    %5 = vector.broadcast %3 : vector<2x1xf32> to vector<2x512xf32>
    %6 = vector.broadcast %4 : vector<1x512xf32> to vector<2x512xf32>
    %7 = arith.mulf %5, %6 : vector<2x512xf32>
    %c0_5 = arith.constant 0 : index
    %c0_6 = arith.constant 0 : index
    %8 = vector.load %arg3[%c0_5, %c0_6] : memref<1x512xf32, #tpu.memory_space<vmem>>, vector<1x512xf32>
    %9 = vector.broadcast %8 : vector<1x512xf32> to vector<2x512xf32>
    %10 = arith.addf %7, %9 : vector<2x512xf32>
    %c0_7 = arith.constant 0 : index
    %c0_8 = arith.constant 0 : index
    %11 = vector.load %arg1[%c0_7, %c0_8] : memref<128x512xf32, #tpu.memory_space<vmem>>, vector<128x512xf32>
    %cst_9 = arith.constant dense<0.000000e+00> : vector<2x512xf32>
    %12 = tpu.matmul %0, %11, %cst_9 {dimension_numbers = #tpu.dot_dimension_numbers<[1], [0], [0], [1], [0, 0, 1, 1], [], []>} : vector<2x128xf32>, vector<128x512xf32>, vector<2x512xf32> -> vector<2x512xf32>
    %13 = arith.addf %10, %12 : vector<2x512xf32>
    %14 = vector.extract_strided_slice %13 {offsets = [0, 0], sizes = [2, 384], strides = [1, 1]} : vector<2x512xf32> to vector<2x384xf32>
    %15 = arith.negf %14 : vector<2x384xf32>
    %16 = math.exp %15 : vector<2x384xf32>
    %cst_10 = arith.constant 1.000000e+00 : f32
    %17 = vector.broadcast %cst_10 : f32 to vector<2x384xf32>
    %18 = arith.addf %17, %16 : vector<2x384xf32>
    %19 = arith.divf %17, %18 : vector<2x384xf32>
    %20 = vector.extract_strided_slice %19 {offsets = [0, 0], sizes = [2, 128], strides = [1, 1]} : vector<2x384xf32> to vector<2x128xf32>
    %21 = vector.extract_strided_slice %19 {offsets = [0, 128], sizes = [2, 128], strides = [1, 1]} : vector<2x384xf32> to vector<2x128xf32>
    %22 = vector.extract_strided_slice %19 {offsets = [0, 256], sizes = [2, 128], strides = [1, 1]} : vector<2x384xf32> to vector<2x128xf32>
    %23 = vector.extract_strided_slice %13 {offsets = [0, 384], sizes = [2, 128], strides = [1, 1]} : vector<2x512xf32> to vector<2x128xf32>
    %24 = math.tanh %23 : vector<2x128xf32>
    %25 = arith.mulf %21, %1 : vector<2x128xf32>
    %26 = arith.mulf %20, %24 : vector<2x128xf32>
    %27 = arith.addf %25, %26 : vector<2x128xf32>
    %28 = math.tanh %27 : vector<2x128xf32>
    %29 = arith.mulf %22, %28 : vector<2x128xf32>
    %30 = tpu.iota {dimensions = array<i32: 1>} : vector<2x128xi32>
    %c64_i32 = arith.constant 64 : i32
    %31 = vector.broadcast %c64_i32 : i32 to vector<2x128xi32>
    %32 = arith.cmpi slt, %30, %31 : vector<2x128xi32>
    %33 = arith.select %32, %29, %0 : vector<2x128xi1>, vector<2x128xf32>
    %34 = arith.select %32, %27, %1 : vector<2x128xi1>, vector<2x128xf32>
    %c1 = arith.constant 1 : index
    %c0_11 = arith.constant 0 : index
    %c0_12 = arith.constant 0 : index
    %35 = vector.load %arg0[%c1, %c0_11, %c0_12] : memref<9x2x1xf32, #tpu.memory_space<vmem>>, vector<1x2x1xf32>
    %36 = vector.shape_cast %35 : vector<1x2x1xf32> to vector<2x1xf32>
    %c0_13 = arith.constant 0 : index
    %c0_14 = arith.constant 0 : index
    %37 = vector.load %arg2[%c0_13, %c0_14] : memref<1x512xf32, #tpu.memory_space<vmem>>, vector<1x512xf32>
    %38 = vector.broadcast %36 : vector<2x1xf32> to vector<2x512xf32>
    %39 = vector.broadcast %37 : vector<1x512xf32> to vector<2x512xf32>
    %40 = arith.mulf %38, %39 : vector<2x512xf32>
    %c0_15 = arith.constant 0 : index
    %c0_16 = arith.constant 0 : index
    %41 = vector.load %arg3[%c0_15, %c0_16] : memref<1x512xf32, #tpu.memory_space<vmem>>, vector<1x512xf32>
    %42 = vector.broadcast %41 : vector<1x512xf32> to vector<2x512xf32>
    %43 = arith.addf %40, %42 : vector<2x512xf32>
    %c0_17 = arith.constant 0 : index
    %c0_18 = arith.constant 0 : index
    %44 = vector.load %arg1[%c0_17, %c0_18] : memref<128x512xf32, #tpu.memory_space<vmem>>, vector<128x512xf32>
    %cst_19 = arith.constant dense<0.000000e+00> : vector<2x512xf32>
    %45 = tpu.matmul %33, %44, %cst_19 {dimension_numbers = #tpu.dot_dimension_numbers<[1], [0], [0], [1], [0, 0, 1, 1], [], []>} : vector<2x128xf32>, vector<128x512xf32>, vector<2x512xf32> -> vector<2x512xf32>
    %46 = arith.addf %43, %45 : vector<2x512xf32>
    %47 = vector.extract_strided_slice %46 {offsets = [0, 0], sizes = [2, 384], strides = [1, 1]} : vector<2x512xf32> to vector<2x384xf32>
    %48 = arith.negf %47 : vector<2x384xf32>
    %49 = math.exp %48 : vector<2x384xf32>
    %cst_20 = arith.constant 1.000000e+00 : f32
    %50 = vector.broadcast %cst_20 : f32 to vector<2x384xf32>
    %51 = arith.addf %50, %49 : vector<2x384xf32>
    %52 = arith.divf %50, %51 : vector<2x384xf32>
    %53 = vector.extract_strided_slice %52 {offsets = [0, 0], sizes = [2, 128], strides = [1, 1]} : vector<2x384xf32> to vector<2x128xf32>
    %54 = vector.extract_strided_slice %52 {offsets = [0, 128], sizes = [2, 128], strides = [1, 1]} : vector<2x384xf32> to vector<2x128xf32>
    %55 = vector.extract_strided_slice %52 {offsets = [0, 256], sizes = [2, 128], strides = [1, 1]} : vector<2x384xf32> to vector<2x128xf32>
    %56 = vector.extract_strided_slice %46 {offsets = [0, 384], sizes = [2, 128], strides = [1, 1]} : vector<2x512xf32> to vector<2x128xf32>
    %57 = math.tanh %56 : vector<2x128xf32>
    %58 = arith.mulf %54, %34 : vector<2x128xf32>
    %59 = arith.mulf %53, %57 : vector<2x128xf32>
    %60 = arith.addf %58, %59 : vector<2x128xf32>
    %61 = math.tanh %60 : vector<2x128xf32>
    %62 = arith.mulf %55, %61 : vector<2x128xf32>
    %c2 = arith.constant 2 : index
    %c0_21 = arith.constant 0 : index
    %c0_22 = arith.constant 0 : index
    %63 = vector.load %arg0[%c2, %c0_21, %c0_22] : memref<9x2x1xf32, #tpu.memory_space<vmem>>, vector<1x2x1xf32>
    %64 = vector.shape_cast %63 : vector<1x2x1xf32> to vector<2x1xf32>
    %c0_23 = arith.constant 0 : index
    %c0_24 = arith.constant 0 : index
    %65 = vector.load %arg2[%c0_23, %c0_24] : memref<1x512xf32, #tpu.memory_space<vmem>>, vector<1x512xf32>
    %66 = vector.broadcast %64 : vector<2x1xf32> to vector<2x512xf32>
    %67 = vector.broadcast %65 : vector<1x512xf32> to vector<2x512xf32>
    %68 = arith.mulf %66, %67 : vector<2x512xf32>
    %c0_25 = arith.constant 0 : index
    %c0_26 = arith.constant 0 : index
    %69 = vector.load %arg3[%c0_25, %c0_26] : memref<1x512xf32, #tpu.memory_space<vmem>>, vector<1x512xf32>
    %70 = vector.broadcast %69 : vector<1x512xf32> to vector<2x512xf32>
    %71 = arith.addf %68, %70 : vector<2x512xf32>
    %c0_27 = arith.constant 0 : index
    %c0_28 = arith.constant 0 : index
    %72 = vector.load %arg1[%c0_27, %c0_28] : memref<128x512xf32, #tpu.memory_space<vmem>>, vector<128x512xf32>
    %cst_29 = arith.constant dense<0.000000e+00> : vector<2x512xf32>
    %73 = tpu.matmul %62, %72, %cst_29 {dimension_numbers = #tpu.dot_dimension_numbers<[1], [0], [0], [1], [0, 0, 1, 1], [], []>} : vector<2x128xf32>, vector<128x512xf32>, vector<2x512xf32> -> vector<2x512xf32>
    %74 = arith.addf %71, %73 : vector<2x512xf32>
    %75 = vector.extract_strided_slice %74 {offsets = [0, 0], sizes = [2, 384], strides = [1, 1]} : vector<2x512xf32> to vector<2x384xf32>
    %76 = arith.negf %75 : vector<2x384xf32>
    %77 = math.exp %76 : vector<2x384xf32>
    %cst_30 = arith.constant 1.000000e+00 : f32
    %78 = vector.broadcast %cst_30 : f32 to vector<2x384xf32>
    %79 = arith.addf %78, %77 : vector<2x384xf32>
    %80 = arith.divf %78, %79 : vector<2x384xf32>
    %81 = vector.extract_strided_slice %80 {offsets = [0, 0], sizes = [2, 128], strides = [1, 1]} : vector<2x384xf32> to vector<2x128xf32>
    %82 = vector.extract_strided_slice %80 {offsets = [0, 128], sizes = [2, 128], strides = [1, 1]} : vector<2x384xf32> to vector<2x128xf32>
    %83 = vector.extract_strided_slice %80 {offsets = [0, 256], sizes = [2, 128], strides = [1, 1]} : vector<2x384xf32> to vector<2x128xf32>
    %84 = vector.extract_strided_slice %74 {offsets = [0, 384], sizes = [2, 128], strides = [1, 1]} : vector<2x512xf32> to vector<2x128xf32>
    %85 = math.tanh %84 : vector<2x128xf32>
    %86 = arith.mulf %82, %60 : vector<2x128xf32>
    %87 = arith.mulf %81, %85 : vector<2x128xf32>
    %88 = arith.addf %86, %87 : vector<2x128xf32>
    %89 = math.tanh %88 : vector<2x128xf32>
    %90 = arith.mulf %83, %89 : vector<2x128xf32>
    %c3 = arith.constant 3 : index
    %c0_31 = arith.constant 0 : index
    %c0_32 = arith.constant 0 : index
    %91 = vector.load %arg0[%c3, %c0_31, %c0_32] : memref<9x2x1xf32, #tpu.memory_space<vmem>>, vector<1x2x1xf32>
    %92 = vector.shape_cast %91 : vector<1x2x1xf32> to vector<2x1xf32>
    %c0_33 = arith.constant 0 : index
    %c0_34 = arith.constant 0 : index
    %93 = vector.load %arg2[%c0_33, %c0_34] : memref<1x512xf32, #tpu.memory_space<vmem>>, vector<1x512xf32>
    %94 = vector.broadcast %92 : vector<2x1xf32> to vector<2x512xf32>
    %95 = vector.broadcast %93 : vector<1x512xf32> to vector<2x512xf32>
    %96 = arith.mulf %94, %95 : vector<2x512xf32>
    %c0_35 = arith.constant 0 : index
    %c0_36 = arith.constant 0 : index
    %97 = vector.load %arg3[%c0_35, %c0_36] : memref<1x512xf32, #tpu.memory_space<vmem>>, vector<1x512xf32>
    %98 = vector.broadcast %97 : vector<1x512xf32> to vector<2x512xf32>
    %99 = arith.addf %96, %98 : vector<2x512xf32>
    %c0_37 = arith.constant 0 : index
    %c0_38 = arith.constant 0 : index
    %100 = vector.load %arg1[%c0_37, %c0_38] : memref<128x512xf32, #tpu.memory_space<vmem>>, vector<128x512xf32>
    %cst_39 = arith.constant dense<0.000000e+00> : vector<2x512xf32>
    %101 = tpu.matmul %90, %100, %cst_39 {dimension_numbers = #tpu.dot_dimension_numbers<[1], [0], [0], [1], [0, 0, 1, 1], [], []>} : vector<2x128xf32>, vector<128x512xf32>, vector<2x512xf32> -> vector<2x512xf32>
    %102 = arith.addf %99, %101 : vector<2x512xf32>
    %103 = vector.extract_strided_slice %102 {offsets = [0, 0], sizes = [2, 384], strides = [1, 1]} : vector<2x512xf32> to vector<2x384xf32>
    %104 = arith.negf %103 : vector<2x384xf32>
    %105 = math.exp %104 : vector<2x384xf32>
    %cst_40 = arith.constant 1.000000e+00 : f32
    %106 = vector.broadcast %cst_40 : f32 to vector<2x384xf32>
    %107 = arith.addf %106, %105 : vector<2x384xf32>
    %108 = arith.divf %106, %107 : vector<2x384xf32>
    %109 = vector.extract_strided_slice %108 {offsets = [0, 0], sizes = [2, 128], strides = [1, 1]} : vector<2x384xf32> to vector<2x128xf32>
    %110 = vector.extract_strided_slice %108 {offsets = [0, 128], sizes = [2, 128], strides = [1, 1]} : vector<2x384xf32> to vector<2x128xf32>
    %111 = vector.extract_strided_slice %108 {offsets = [0, 256], sizes = [2, 128], strides = [1, 1]} : vector<2x384xf32> to vector<2x128xf32>
    %112 = vector.extract_strided_slice %102 {offsets = [0, 384], sizes = [2, 128], strides = [1, 1]} : vector<2x512xf32> to vector<2x128xf32>
    %113 = math.tanh %112 : vector<2x128xf32>
    %114 = arith.mulf %110, %88 : vector<2x128xf32>
    %115 = arith.mulf %109, %113 : vector<2x128xf32>
    %116 = arith.addf %114, %115 : vector<2x128xf32>
    %117 = math.tanh %116 : vector<2x128xf32>
    %118 = arith.mulf %111, %117 : vector<2x128xf32>
    %c4 = arith.constant 4 : index
    %c0_41 = arith.constant 0 : index
    %c0_42 = arith.constant 0 : index
    %119 = vector.load %arg0[%c4, %c0_41, %c0_42] : memref<9x2x1xf32, #tpu.memory_space<vmem>>, vector<1x2x1xf32>
    %120 = vector.shape_cast %119 : vector<1x2x1xf32> to vector<2x1xf32>
    %c0_43 = arith.constant 0 : index
    %c0_44 = arith.constant 0 : index
    %121 = vector.load %arg2[%c0_43, %c0_44] : memref<1x512xf32, #tpu.memory_space<vmem>>, vector<1x512xf32>
    %122 = vector.broadcast %120 : vector<2x1xf32> to vector<2x512xf32>
    %123 = vector.broadcast %121 : vector<1x512xf32> to vector<2x512xf32>
    %124 = arith.mulf %122, %123 : vector<2x512xf32>
    %c0_45 = arith.constant 0 : index
    %c0_46 = arith.constant 0 : index
    %125 = vector.load %arg3[%c0_45, %c0_46] : memref<1x512xf32, #tpu.memory_space<vmem>>, vector<1x512xf32>
    %126 = vector.broadcast %125 : vector<1x512xf32> to vector<2x512xf32>
    %127 = arith.addf %124, %126 : vector<2x512xf32>
    %c0_47 = arith.constant 0 : index
    %c0_48 = arith.constant 0 : index
    %128 = vector.load %arg1[%c0_47, %c0_48] : memref<128x512xf32, #tpu.memory_space<vmem>>, vector<128x512xf32>
    %cst_49 = arith.constant dense<0.000000e+00> : vector<2x512xf32>
    %129 = tpu.matmul %118, %128, %cst_49 {dimension_numbers = #tpu.dot_dimension_numbers<[1], [0], [0], [1], [0, 0, 1, 1], [], []>} : vector<2x128xf32>, vector<128x512xf32>, vector<2x512xf32> -> vector<2x512xf32>
    %130 = arith.addf %127, %129 : vector<2x512xf32>
    %131 = vector.extract_strided_slice %130 {offsets = [0, 0], sizes = [2, 384], strides = [1, 1]} : vector<2x512xf32> to vector<2x384xf32>
    %132 = arith.negf %131 : vector<2x384xf32>
    %133 = math.exp %132 : vector<2x384xf32>
    %cst_50 = arith.constant 1.000000e+00 : f32
    %134 = vector.broadcast %cst_50 : f32 to vector<2x384xf32>
    %135 = arith.addf %134, %133 : vector<2x384xf32>
    %136 = arith.divf %134, %135 : vector<2x384xf32>
    %137 = vector.extract_strided_slice %136 {offsets = [0, 0], sizes = [2, 128], strides = [1, 1]} : vector<2x384xf32> to vector<2x128xf32>
    %138 = vector.extract_strided_slice %136 {offsets = [0, 128], sizes = [2, 128], strides = [1, 1]} : vector<2x384xf32> to vector<2x128xf32>
    %139 = vector.extract_strided_slice %136 {offsets = [0, 256], sizes = [2, 128], strides = [1, 1]} : vector<2x384xf32> to vector<2x128xf32>
    %140 = vector.extract_strided_slice %130 {offsets = [0, 384], sizes = [2, 128], strides = [1, 1]} : vector<2x512xf32> to vector<2x128xf32>
    %141 = math.tanh %140 : vector<2x128xf32>
    %142 = arith.mulf %138, %116 : vector<2x128xf32>
    %143 = arith.mulf %137, %141 : vector<2x128xf32>
    %144 = arith.addf %142, %143 : vector<2x128xf32>
    %145 = math.tanh %144 : vector<2x128xf32>
    %146 = arith.mulf %139, %145 : vector<2x128xf32>
    %c5 = arith.constant 5 : index
    %c0_51 = arith.constant 0 : index
    %c0_52 = arith.constant 0 : index
    %147 = vector.load %arg0[%c5, %c0_51, %c0_52] : memref<9x2x1xf32, #tpu.memory_space<vmem>>, vector<1x2x1xf32>
    %148 = vector.shape_cast %147 : vector<1x2x1xf32> to vector<2x1xf32>
    %c0_53 = arith.constant 0 : index
    %c0_54 = arith.constant 0 : index
    %149 = vector.load %arg2[%c0_53, %c0_54] : memref<1x512xf32, #tpu.memory_space<vmem>>, vector<1x512xf32>
    %150 = vector.broadcast %148 : vector<2x1xf32> to vector<2x512xf32>
    %151 = vector.broadcast %149 : vector<1x512xf32> to vector<2x512xf32>
    %152 = arith.mulf %150, %151 : vector<2x512xf32>
    %c0_55 = arith.constant 0 : index
    %c0_56 = arith.constant 0 : index
    %153 = vector.load %arg3[%c0_55, %c0_56] : memref<1x512xf32, #tpu.memory_space<vmem>>, vector<1x512xf32>
    %154 = vector.broadcast %153 : vector<1x512xf32> to vector<2x512xf32>
    %155 = arith.addf %152, %154 : vector<2x512xf32>
    %c0_57 = arith.constant 0 : index
    %c0_58 = arith.constant 0 : index
    %156 = vector.load %arg1[%c0_57, %c0_58] : memref<128x512xf32, #tpu.memory_space<vmem>>, vector<128x512xf32>
    %cst_59 = arith.constant dense<0.000000e+00> : vector<2x512xf32>
    %157 = tpu.matmul %146, %156, %cst_59 {dimension_numbers = #tpu.dot_dimension_numbers<[1], [0], [0], [1], [0, 0, 1, 1], [], []>} : vector<2x128xf32>, vector<128x512xf32>, vector<2x512xf32> -> vector<2x512xf32>
    %158 = arith.addf %155, %157 : vector<2x512xf32>
    %159 = vector.extract_strided_slice %158 {offsets = [0, 0], sizes = [2, 384], strides = [1, 1]} : vector<2x512xf32> to vector<2x384xf32>
    %160 = arith.negf %159 : vector<2x384xf32>
    %161 = math.exp %160 : vector<2x384xf32>
    %cst_60 = arith.constant 1.000000e+00 : f32
    %162 = vector.broadcast %cst_60 : f32 to vector<2x384xf32>
    %163 = arith.addf %162, %161 : vector<2x384xf32>
    %164 = arith.divf %162, %163 : vector<2x384xf32>
    %165 = vector.extract_strided_slice %164 {offsets = [0, 0], sizes = [2, 128], strides = [1, 1]} : vector<2x384xf32> to vector<2x128xf32>
    %166 = vector.extract_strided_slice %164 {offsets = [0, 128], sizes = [2, 128], strides = [1, 1]} : vector<2x384xf32> to vector<2x128xf32>
    %167 = vector.extract_strided_slice %164 {offsets = [0, 256], sizes = [2, 128], strides = [1, 1]} : vector<2x384xf32> to vector<2x128xf32>
    %168 = vector.extract_strided_slice %158 {offsets = [0, 384], sizes = [2, 128], strides = [1, 1]} : vector<2x512xf32> to vector<2x128xf32>
    %169 = math.tanh %168 : vector<2x128xf32>
    %170 = arith.mulf %166, %144 : vector<2x128xf32>
    %171 = arith.mulf %165, %169 : vector<2x128xf32>
    %172 = arith.addf %170, %171 : vector<2x128xf32>
    %173 = math.tanh %172 : vector<2x128xf32>
    %174 = arith.mulf %167, %173 : vector<2x128xf32>
    %c6 = arith.constant 6 : index
    %c0_61 = arith.constant 0 : index
    %c0_62 = arith.constant 0 : index
    %175 = vector.load %arg0[%c6, %c0_61, %c0_62] : memref<9x2x1xf32, #tpu.memory_space<vmem>>, vector<1x2x1xf32>
    %176 = vector.shape_cast %175 : vector<1x2x1xf32> to vector<2x1xf32>
    %c0_63 = arith.constant 0 : index
    %c0_64 = arith.constant 0 : index
    %177 = vector.load %arg2[%c0_63, %c0_64] : memref<1x512xf32, #tpu.memory_space<vmem>>, vector<1x512xf32>
    %178 = vector.broadcast %176 : vector<2x1xf32> to vector<2x512xf32>
    %179 = vector.broadcast %177 : vector<1x512xf32> to vector<2x512xf32>
    %180 = arith.mulf %178, %179 : vector<2x512xf32>
    %c0_65 = arith.constant 0 : index
    %c0_66 = arith.constant 0 : index
    %181 = vector.load %arg3[%c0_65, %c0_66] : memref<1x512xf32, #tpu.memory_space<vmem>>, vector<1x512xf32>
    %182 = vector.broadcast %181 : vector<1x512xf32> to vector<2x512xf32>
    %183 = arith.addf %180, %182 : vector<2x512xf32>
    %c0_67 = arith.constant 0 : index
    %c0_68 = arith.constant 0 : index
    %184 = vector.load %arg1[%c0_67, %c0_68] : memref<128x512xf32, #tpu.memory_space<vmem>>, vector<128x512xf32>
    %cst_69 = arith.constant dense<0.000000e+00> : vector<2x512xf32>
    %185 = tpu.matmul %174, %184, %cst_69 {dimension_numbers = #tpu.dot_dimension_numbers<[1], [0], [0], [1], [0, 0, 1, 1], [], []>} : vector<2x128xf32>, vector<128x512xf32>, vector<2x512xf32> -> vector<2x512xf32>
    %186 = arith.addf %183, %185 : vector<2x512xf32>
    %187 = vector.extract_strided_slice %186 {offsets = [0, 0], sizes = [2, 384], strides = [1, 1]} : vector<2x512xf32> to vector<2x384xf32>
    %188 = arith.negf %187 : vector<2x384xf32>
    %189 = math.exp %188 : vector<2x384xf32>
    %cst_70 = arith.constant 1.000000e+00 : f32
    %190 = vector.broadcast %cst_70 : f32 to vector<2x384xf32>
    %191 = arith.addf %190, %189 : vector<2x384xf32>
    %192 = arith.divf %190, %191 : vector<2x384xf32>
    %193 = vector.extract_strided_slice %192 {offsets = [0, 0], sizes = [2, 128], strides = [1, 1]} : vector<2x384xf32> to vector<2x128xf32>
    %194 = vector.extract_strided_slice %192 {offsets = [0, 128], sizes = [2, 128], strides = [1, 1]} : vector<2x384xf32> to vector<2x128xf32>
    %195 = vector.extract_strided_slice %192 {offsets = [0, 256], sizes = [2, 128], strides = [1, 1]} : vector<2x384xf32> to vector<2x128xf32>
    %196 = vector.extract_strided_slice %186 {offsets = [0, 384], sizes = [2, 128], strides = [1, 1]} : vector<2x512xf32> to vector<2x128xf32>
    %197 = math.tanh %196 : vector<2x128xf32>
    %198 = arith.mulf %194, %172 : vector<2x128xf32>
    %199 = arith.mulf %193, %197 : vector<2x128xf32>
    %200 = arith.addf %198, %199 : vector<2x128xf32>
    %201 = math.tanh %200 : vector<2x128xf32>
    %202 = arith.mulf %195, %201 : vector<2x128xf32>
    %c7 = arith.constant 7 : index
    %c0_71 = arith.constant 0 : index
    %c0_72 = arith.constant 0 : index
    %203 = vector.load %arg0[%c7, %c0_71, %c0_72] : memref<9x2x1xf32, #tpu.memory_space<vmem>>, vector<1x2x1xf32>
    %204 = vector.shape_cast %203 : vector<1x2x1xf32> to vector<2x1xf32>
    %c0_73 = arith.constant 0 : index
    %c0_74 = arith.constant 0 : index
    %205 = vector.load %arg2[%c0_73, %c0_74] : memref<1x512xf32, #tpu.memory_space<vmem>>, vector<1x512xf32>
    %206 = vector.broadcast %204 : vector<2x1xf32> to vector<2x512xf32>
    %207 = vector.broadcast %205 : vector<1x512xf32> to vector<2x512xf32>
    %208 = arith.mulf %206, %207 : vector<2x512xf32>
    %c0_75 = arith.constant 0 : index
    %c0_76 = arith.constant 0 : index
    %209 = vector.load %arg3[%c0_75, %c0_76] : memref<1x512xf32, #tpu.memory_space<vmem>>, vector<1x512xf32>
    %210 = vector.broadcast %209 : vector<1x512xf32> to vector<2x512xf32>
    %211 = arith.addf %208, %210 : vector<2x512xf32>
    %c0_77 = arith.constant 0 : index
    %c0_78 = arith.constant 0 : index
    %212 = vector.load %arg1[%c0_77, %c0_78] : memref<128x512xf32, #tpu.memory_space<vmem>>, vector<128x512xf32>
    %cst_79 = arith.constant dense<0.000000e+00> : vector<2x512xf32>
    %213 = tpu.matmul %202, %212, %cst_79 {dimension_numbers = #tpu.dot_dimension_numbers<[1], [0], [0], [1], [0, 0, 1, 1], [], []>} : vector<2x128xf32>, vector<128x512xf32>, vector<2x512xf32> -> vector<2x512xf32>
    %214 = arith.addf %211, %213 : vector<2x512xf32>
    %215 = vector.extract_strided_slice %214 {offsets = [0, 0], sizes = [2, 384], strides = [1, 1]} : vector<2x512xf32> to vector<2x384xf32>
    %216 = arith.negf %215 : vector<2x384xf32>
    %217 = math.exp %216 : vector<2x384xf32>
    %cst_80 = arith.constant 1.000000e+00 : f32
    %218 = vector.broadcast %cst_80 : f32 to vector<2x384xf32>
    %219 = arith.addf %218, %217 : vector<2x384xf32>
    %220 = arith.divf %218, %219 : vector<2x384xf32>
    %221 = vector.extract_strided_slice %220 {offsets = [0, 0], sizes = [2, 128], strides = [1, 1]} : vector<2x384xf32> to vector<2x128xf32>
    %222 = vector.extract_strided_slice %220 {offsets = [0, 128], sizes = [2, 128], strides = [1, 1]} : vector<2x384xf32> to vector<2x128xf32>
    %223 = vector.extract_strided_slice %220 {offsets = [0, 256], sizes = [2, 128], strides = [1, 1]} : vector<2x384xf32> to vector<2x128xf32>
    %224 = vector.extract_strided_slice %214 {offsets = [0, 384], sizes = [2, 128], strides = [1, 1]} : vector<2x512xf32> to vector<2x128xf32>
    %225 = math.tanh %224 : vector<2x128xf32>
    %226 = arith.mulf %222, %200 : vector<2x128xf32>
    %227 = arith.mulf %221, %225 : vector<2x128xf32>
    %228 = arith.addf %226, %227 : vector<2x128xf32>
    %229 = math.tanh %228 : vector<2x128xf32>
    %230 = arith.mulf %223, %229 : vector<2x128xf32>
    %c8 = arith.constant 8 : index
    %c0_81 = arith.constant 0 : index
    %c0_82 = arith.constant 0 : index
    %231 = vector.load %arg0[%c8, %c0_81, %c0_82] : memref<9x2x1xf32, #tpu.memory_space<vmem>>, vector<1x2x1xf32>
    %232 = vector.shape_cast %231 : vector<1x2x1xf32> to vector<2x1xf32>
    %c0_83 = arith.constant 0 : index
    %c0_84 = arith.constant 0 : index
    %233 = vector.load %arg2[%c0_83, %c0_84] : memref<1x512xf32, #tpu.memory_space<vmem>>, vector<1x512xf32>
    %234 = vector.broadcast %232 : vector<2x1xf32> to vector<2x512xf32>
    %235 = vector.broadcast %233 : vector<1x512xf32> to vector<2x512xf32>
    %236 = arith.mulf %234, %235 : vector<2x512xf32>
    %c0_85 = arith.constant 0 : index
    %c0_86 = arith.constant 0 : index
    %237 = vector.load %arg3[%c0_85, %c0_86] : memref<1x512xf32, #tpu.memory_space<vmem>>, vector<1x512xf32>
    %238 = vector.broadcast %237 : vector<1x512xf32> to vector<2x512xf32>
    %239 = arith.addf %236, %238 : vector<2x512xf32>
    %c0_87 = arith.constant 0 : index
    %c0_88 = arith.constant 0 : index
    %240 = vector.load %arg1[%c0_87, %c0_88] : memref<128x512xf32, #tpu.memory_space<vmem>>, vector<128x512xf32>
    %cst_89 = arith.constant dense<0.000000e+00> : vector<2x512xf32>
    %241 = tpu.matmul %230, %240, %cst_89 {dimension_numbers = #tpu.dot_dimension_numbers<[1], [0], [0], [1], [0, 0, 1, 1], [], []>} : vector<2x128xf32>, vector<128x512xf32>, vector<2x512xf32> -> vector<2x512xf32>
    %242 = arith.addf %239, %241 : vector<2x512xf32>
    %243 = vector.extract_strided_slice %242 {offsets = [0, 0], sizes = [2, 384], strides = [1, 1]} : vector<2x512xf32> to vector<2x384xf32>
    %244 = arith.negf %243 : vector<2x384xf32>
    %245 = math.exp %244 : vector<2x384xf32>
    %cst_90 = arith.constant 1.000000e+00 : f32
    %246 = vector.broadcast %cst_90 : f32 to vector<2x384xf32>
    %247 = arith.addf %246, %245 : vector<2x384xf32>
    %248 = arith.divf %246, %247 : vector<2x384xf32>
    %249 = vector.extract_strided_slice %248 {offsets = [0, 0], sizes = [2, 128], strides = [1, 1]} : vector<2x384xf32> to vector<2x128xf32>
    %250 = vector.extract_strided_slice %248 {offsets = [0, 128], sizes = [2, 128], strides = [1, 1]} : vector<2x384xf32> to vector<2x128xf32>
    %251 = vector.extract_strided_slice %248 {offsets = [0, 256], sizes = [2, 128], strides = [1, 1]} : vector<2x384xf32> to vector<2x128xf32>
    %252 = vector.extract_strided_slice %242 {offsets = [0, 384], sizes = [2, 128], strides = [1, 1]} : vector<2x512xf32> to vector<2x128xf32>
    %253 = math.tanh %252 : vector<2x128xf32>
    %254 = arith.mulf %250, %228 : vector<2x128xf32>
    %255 = arith.mulf %249, %253 : vector<2x128xf32>
    %256 = arith.addf %254, %255 : vector<2x128xf32>
    %257 = math.tanh %256 : vector<2x128xf32>
    %258 = arith.mulf %251, %257 : vector<2x128xf32>
    %259 = vector.extract_strided_slice %258 {offsets = [0, 64], sizes = [2, 64], strides = [1, 1]} : vector<2x128xf32> to vector<2x64xf32>
    %c0_91 = arith.constant 0 : index
    %c0_92 = arith.constant 0 : index
    %260 = vector.load %arg4[%c0_91, %c0_92] : memref<1x64xf32, #tpu.memory_space<vmem>>, vector<1x64xf32>
    %261 = vector.broadcast %260 : vector<1x64xf32> to vector<2x64xf32>
    %262 = arith.mulf %259, %261 : vector<2x64xf32>
    %cst_93 = arith.constant dense<0.000000e+00> : vector<2xf32>
    %263 = vector.multi_reduction <add>, %262, %cst_93 [1] : vector<2x64xf32> to vector<2xf32>
    %264 = vector.shape_cast %263 : vector<2xf32> to vector<2x1xf32>
    %c0_94 = arith.constant 0 : index
    %c0_95 = arith.constant 0 : index
    %265 = vector.load %arg5[%c0_94, %c0_95] : memref<1x1xf32, #tpu.memory_space<vmem>>, vector<1x1xf32>
    %266 = vector.broadcast %265 : vector<1x1xf32> to vector<2x1xf32>
    %267 = arith.addf %264, %266 : vector<2x1xf32>
    %268 = vector.shape_cast %267 : vector<2x1xf32> to vector<2x1xf32>
    %269 = vector.broadcast %268 : vector<2x1xf32> to vector<2x128xf32>
    %c0_96 = arith.constant 0 : index
    %c0_97 = arith.constant 0 : index
    %270 = vector.load %arg6[%c0_96, %c0_97] : memref<2x128xf32, #tpu.memory_space<vmem>>, vector<2x128xf32>
    tpu.vector_store %arg6[%c0_96, %c0_97], %269 {strides = array<i32>} : memref<2x128xf32, #tpu.memory_space<vmem>>, vector<2x128xf32>,
    return
  }
}

</mosaic_0001>

<llo_original>
// kernel: tpu_custom_call.1
$region0: #{tpu_custom_call.1}
  #allocation0 [shape = 'u32[]', space=smem, size = 0x4, offset = 0x4, fixed_abs, tag = 'smem constant byte address 0x4 - core index']
  #allocation1 [shape = 'u32[72,128]{1,0:T(1,128)}', space=vmem, size = 0x9000, scoped, tag = 'internal scratch']
  #allocation2 [shape = 'f32[1,1]{1,0:T(1,128)S(1)}', space=vmem, size = 0x200, scoped, tag = 'scoped memory for tpu_custom_call.1']
  %s0 = inlined_call_operand.vmem [shape: f32[9,2,1], index: 0, kind: input, shape index: {}]
  %s1 = inlined_call_operand.hbm [shape: f32[128,512], index: 1, kind: input, shape index: {}]
  %s2 = inlined_call_operand.vmem [shape: f32[1,512], index: 2, kind: input, shape index: {}]
  %s3 = inlined_call_operand.vmem [shape: f32[1,512], index: 3, kind: input, shape index: {}]
  %s4 = inlined_call_operand.vmem [shape: f32[1,64], index: 4, kind: input, shape index: {}]
  %s5 = inlined_call_operand.<no memory space> [shape: f32[1,1], index: 5, kind: input, shape index: {}]
  %s6 = inlined_call_operand.hbm [shape: f32[2,128], index: 6, kind: output, shape index: {}]
  %s7 = sld [smem:[#allocation0]]
  $region38: #{tpu_custom_call.1} parent=0
    _
  %s9 = ssub.s32 1, %s7
  %s10 = scalar_select 0, %s9, %s7
  %v11 = vstv %s5
  %12 = vst [vmem:[#allocation2] sm:$0x1] %v11
  $region1: #{tpu_custom_call.1} parent=0
    #allocation3 [shape = 'u8[262144]{0}', space=vmem, size = 0x40000, scoped, tag = 'input window, operand 1, single buffered']
    #allocation4 [shape = 's32[1]{0}', space=sflag, size = 0x4, scoped, tag = 'scoped memory for tpu_custom_call.1']
    #allocation5 [shape = 's32[1]{0}', space=sflag, size = 0x4, scoped, tag = 'scoped memory for tpu_custom_call.1']
    #allocation6 [shape = 'u8[1024]{0}', space=vmem, size = 0x400, scoped, tag = 'output window, operand 0, single buffered']
    %13 = vsyncpa [#allocation4], 0
    %14 = vsyncpa [#allocation5], 0
    // Predicated region
    $region2: #{tpu_custom_call.1} parent=1 // pred_check
      _
    $region3: #{tpu_custom_call.1} parent=1 // pred_check_branch
      %16 = sbr.rel (0) target = $region5
    $region4: #{tpu_custom_call.1} parent=1 // pred_region
      _
    $region5: #{tpu_custom_call.1} parent=1 // pred_fallthru
      _
    // Predicated region
    $region6: #{tpu_custom_call.1} parent=1 // pred_check
      _
    $region7: #{tpu_custom_call.1} parent=1 // pred_check_branch
      %18 = sbr.rel (0) target = $region9
    $region8: #{tpu_custom_call.1} parent=1 // pred_region
      %20 = vsyncadd [#allocation4], 0
      %s21 = sshll.u32 %s1, 4
      %s22 = int_to_ptr.hbm [resolvable:$true] %s21
      %s23 = sshll.u32 [#allocation3], 4
      %s24 = int_to_ptr.vmem [resolvable:$true] %s23
      %29 = dma.hbm_to_vmem [thread:$0]  %s22, 8192, %s24, [#allocation4], 512, 512, 32
    $region9: #{tpu_custom_call.1} parent=1 // pred_fallthru
      _
    // Predicated region
    $region10: #{tpu_custom_call.1} parent=1 // pred_check
      _
    $region11: #{tpu_custom_call.1} parent=1 // pred_check_branch
      %31 = sbr.rel (0) target = $region13
    $region12: #{tpu_custom_call.1} parent=1 // pred_region
      _
    $region13: #{tpu_custom_call.1} parent=1 // pred_fallthru
      _
    // Predicated region
    $region14: #{tpu_custom_call.1} parent=1 // pred_check
      _
    $region15: #{tpu_custom_call.1} parent=1 // pred_check_branch
      %33 = sbr.rel (0) target = $region17
    $region16: #{tpu_custom_call.1} parent=1 // pred_region
      _
    $region17: #{tpu_custom_call.1} parent=1 // pred_fallthru
      _
    // Predicated region
    $region18: #{tpu_custom_call.1} parent=1 // pred_check
      _
    $region19: #{tpu_custom_call.1} parent=1 // pred_check_branch
      %35 = sbr.rel (0) target = $region21
    $region20: #{tpu_custom_call.1} parent=1 // pred_region
      _
    $region21: #{tpu_custom_call.1} parent=1 // pred_fallthru
      _
    // Predicated region
    $region22: #{tpu_custom_call.1} parent=1 // pred_check
      _
    $region23: #{tpu_custom_call.1} parent=1 // pred_check_branch
      %37 = sbr.rel (0) target = $region25
    $region24: #{tpu_custom_call.1} parent=1 // pred_region
      _
    $region25: #{tpu_custom_call.1} parent=1 // pred_fallthru
      _
    // Predicated region
    $region26: #{tpu_custom_call.1} parent=1 // pred_check
      _
    $region27: #{tpu_custom_call.1} parent=1 // pred_check_branch
      %39 = sbr.rel (0) target = $region29
    $region28: #{tpu_custom_call.1} parent=1 // pred_region
      %41 = dma.done [#allocation4], 8192
    $region29: #{tpu_custom_call.1} parent=1 // pred_fallthru
      _
    %v42 = vld [vmem:[%s0] sm:$0x3]
    %v43 = vld [vmem:[%s2] sm:$0xf]
    %45 = vset.pattern.permute.xlu0 0
    %46 = vperm.xlu0 %45, %v42
    %v47 = vpop.permute.xlu0 %46
    %v50 = vperm.slane %v43, 0
    %v51 = vperm.slane %v43, 1
    %v52 = vperm.slane %v43, 2
    %v53 = vperm.slane %v43, 3
    %v58 = vmul.f32 %v47, %v50
    %v59 = vmul.f32 %v47, %v51
    %v60 = vmul.f32 %v47, %v52
    %v61 = vmul.f32 %v47, %v53
    %v62 = vld [vmem:[%s3] sm:$0xf]
    %v64 = vperm.slane %v62, 0
    %v65 = vperm.slane %v62, 1
    %v66 = vperm.slane %v62, 2
    %v67 = vperm.slane %v62, 3
    %v72 = vadd.f32 %v58, %v64
    %v73 = vadd.f32 %v59, %v65
    %v74 = vadd.f32 %v60, %v66
    %v75 = vadd.f32 %v61, %v67
    %v76 = vld [vmem:[#allocation3] sm:$0xff]
    %v77 = vld [vmem:[#allocation3 + $0x8] sm:$0xff]
    %v78 = vld [vmem:[#allocation3 + $0x10] sm:$0xff]
    %v79 = vld [vmem:[#allocation3 + $0x18] sm:$0xff]
    %v80 = vld [vmem:[#allocation3 + $0x20] sm:$0xff]
    %v81 = vld [vmem:[#allocation3 + $0x28] sm:$0xff]
    %v82 = vld [vmem:[#allocation3 + $0x30] sm:$0xff]
    %v83 = vld [vmem:[#allocation3 + $0x38] sm:$0xff]
    %v84 = vld [vmem:[#allocation3 + $0x40] sm:$0xff]
    %v85 = vld [vmem:[#allocation3 + $0x48] sm:$0xff]
    %v86 = vld [vmem:[#allocation3 + $0x50] sm:$0xff]
    %v87 = vld [vmem:[#allocation3 + $0x58] sm:$0xff]
    %v88 = vld [vmem:[#allocation3 + $0x60] sm:$0xff]
    %v89 = vld [vmem:[#allocation3 + $0x68] sm:$0xff]
    %v90 = vld [vmem:[#allocation3 + $0x70] sm:$0xff]
    %v91 = vld [vmem:[#allocation3 + $0x78] sm:$0xff]
    %v92 = vld [vmem:[#allocation3 + $0x80] sm:$0xff]
    %v93 = vld [vmem:[#allocation3 + $0x88] sm:$0xff]
    %v94 = vld [vmem:[#allocation3 + $0x90] sm:$0xff]
    %v95 = vld [vmem:[#allocation3 + $0x98] sm:$0xff]
    %v96 = vld [vmem:[#allocation3 + $0xa0] sm:$0xff]
    %v97 = vld [vmem:[#allocation3 + $0xa8] sm:$0xff]
    %v98 = vld [vmem:[#allocation3 + $0xb0] sm:$0xff]
    %v99 = vld [vmem:[#allocation3 + $0xb8] sm:$0xff]
    %v100 = vld [vmem:[#allocation3 + $0xc0] sm:$0xff]
    %v101 = vld [vmem:[#allocation3 + $0xc8] sm:$0xff]
    %v102 = vld [vmem:[#allocation3 + $0xd0] sm:$0xff]
    %v103 = vld [vmem:[#allocation3 + $0xd8] sm:$0xff]
    %v104 = vld [vmem:[#allocation3 + $0xe0] sm:$0xff]
    %v105 = vld [vmem:[#allocation3 + $0xe8] sm:$0xff]
    %v106 = vld [vmem:[#allocation3 + $0xf0] sm:$0xff]
    %v107 = vld [vmem:[#allocation3 + $0xf8] sm:$0xff]
    %v108 = vld [vmem:[#allocation3 + $0x100] sm:$0xff]
    %v109 = vld [vmem:[#allocation3 + $0x108] sm:$0xff]
    %v110 = vld [vmem:[#allocation3 + $0x110] sm:$0xff]
    %v111 = vld [vmem:[#allocation3 + $0x118] sm:$0xff]
    %v112 = vld [vmem:[#allocation3 + $0x120] sm:$0xff]
    %v113 = vld [vmem:[#allocation3 + $0x128] sm:$0xff]
    %v114 = vld [vmem:[#allocation3 + $0x130] sm:$0xff]
    %v115 = vld [vmem:[#allocation3 + $0x138] sm:$0xff]
    %v116 = vld [vmem:[#allocation3 + $0x140] sm:$0xff]
    %v117 = vld [vmem:[#allocation3 + $0x148] sm:$0xff]
    %v118 = vld [vmem:[#allocation3 + $0x150] sm:$0xff]
    %v119 = vld [vmem:[#allocation3 + $0x158] sm:$0xff]
    %v120 = vld [vmem:[#allocation3 + $0x160] sm:$0xff]
    %v121 = vld [vmem:[#allocation3 + $0x168] sm:$0xff]
    %v122 = vld [vmem:[#allocation3 + $0x170] sm:$0xff]
    %v123 = vld [vmem:[#allocation3 + $0x178] sm:$0xff]
    %v124 = vld [vmem:[#allocation3 + $0x180] sm:$0xff]
    %v125 = vld [vmem:[#allocation3 + $0x188] sm:$0xff]
    %v126 = vld [vmem:[#allocation3 + $0x190] sm:$0xff]
    %v127 = vld [vmem:[#allocation3 + $0x198] sm:$0xff]
    %v128 = vld [vmem:[#allocation3 + $0x1a0] sm:$0xff]
    %v129 = vld [vmem:[#allocation3 + $0x1a8] sm:$0xff]
    %v130 = vld [vmem:[#allocation3 + $0x1b0] sm:$0xff]
    %v131 = vld [vmem:[#allocation3 + $0x1b8] sm:$0xff]
    %v132 = vld [vmem:[#allocation3 + $0x1c0] sm:$0xff]
    %v133 = vld [vmem:[#allocation3 + $0x1c8] sm:$0xff]
    %v134 = vld [vmem:[#allocation3 + $0x1d0] sm:$0xff]
    %v135 = vld [vmem:[#allocation3 + $0x1d8] sm:$0xff]
    %v136 = vld [vmem:[#allocation3 + $0x1e0] sm:$0xff]
    %v137 = vld [vmem:[#allocation3 + $0x1e8] sm:$0xff]
    %v138 = vld [vmem:[#allocation3 + $0x1f0] sm:$0xff]
    %v139 = vld [vmem:[#allocation3 + $0x1f8] sm:$0xff]
    %140 = vmatpush.msra.mxu0 %v136
    %141 = vmatpush.msra.mxu0 %v132
    %142 = vmatpush.msra.mxu0 %v128
    %143 = vmatpush.msra.mxu0 %v124
    %144 = vmatpush.msra.mxu0 %v120
    %145 = vmatpush.msra.mxu0 %v116
    %146 = vmatpush.msra.mxu0 %v112
    %147 = vmatpush.msra.mxu0 %v108
    %148 = vmatpush.msra.mxu0 %v104
    %149 = vmatpush.msra.mxu0 %v100
    %150 = vmatpush.msra.mxu0 %v96
    %151 = vmatpush.msra.mxu0 %v92
    %152 = vmatpush.msra.mxu0 %v88
    %153 = vmatpush.msra.mxu0 %v84
    %154 = vmatpush.msra.mxu0 %v80
    %155 = vmatpush.msra.mxu0 %v76
    %156 = vmatmul.f32.gmra.mxu0 0.0
    %v157 = vpop.f32.mrf.mxu0
    %v158 = vadd.f32 0.0, %v157
    %159 = vdwg.mxu0
    %160 = vmatpush.msra.mxu0 %v137
    %161 = vmatpush.msra.mxu0 %v133
    %162 = vmatpush.msra.mxu0 %v129
    %163 = vmatpush.msra.mxu0 %v125
    %164 = vmatpush.msra.mxu0 %v121
    %165 = vmatpush.msra.mxu0 %v117
    %166 = vmatpush.msra.mxu0 %v113
    %167 = vmatpush.msra.mxu0 %v109
    %168 = vmatpush.msra.mxu0 %v105
    %169 = vmatpush.msra.mxu0 %v101
    %170 = vmatpush.msra.mxu0 %v97
    %171 = vmatpush.msra.mxu0 %v93
    %172 = vmatpush.msra.mxu0 %v89
    %173 = vmatpush.msra.mxu0 %v85
    %174 = vmatpush.msra.mxu0 %v81
    %175 = vmatpush.msra.mxu0 %v77
    %176 = vmatmul.f32.gmra.mxu0 0.0
    %v177 = vpop.f32.mrf.mxu0
    %v178 = vadd.f32 0.0, %v177
    %179 = vdwg.mxu0
    %180 = vmatpush.msra.mxu0 %v138
    %181 = vmatpush.msra.mxu0 %v134
    %182 = vmatpush.msra.mxu0 %v130
    %183 = vmatpush.msra.mxu0 %v126
    %184 = vmatpush.msra.mxu0 %v122
    %185 = vmatpush.msra.mxu0 %v118
    %186 = vmatpush.msra.mxu0 %v114
    %187 = vmatpush.msra.mxu0 %v110
    %188 = vmatpush.msra.mxu0 %v106
    %189 = vmatpush.msra.mxu0 %v102
    %190 = vmatpush.msra.mxu0 %v98
    %191 = vmatpush.msra.mxu0 %v94
    %192 = vmatpush.msra.mxu0 %v90
    %193 = vmatpush.msra.mxu0 %v86
    %194 = vmatpush.msra.mxu0 %v82
    %195 = vmatpush.msra.mxu0 %v78
    %196 = vmatmul.f32.gmra.mxu0 0.0
    %v197 = vpop.f32.mrf.mxu0
    %v198 = vadd.f32 0.0, %v197
    %199 = vdwg.mxu0
    %200 = vmatpush.msra.mxu0 %v139
    %201 = vmatpush.msra.mxu0 %v135
    %202 = vmatpush.msra.mxu0 %v131
    %203 = vmatpush.msra.mxu0 %v127
    %204 = vmatpush.msra.mxu0 %v123
    %205 = vmatpush.msra.mxu0 %v119
    %206 = vmatpush.msra.mxu0 %v115
    %207 = vmatpush.msra.mxu0 %v111
    %208 = vmatpush.msra.mxu0 %v107
    %209 = vmatpush.msra.mxu0 %v103
    %210 = vmatpush.msra.mxu0 %v99
    %211 = vmatpush.msra.mxu0 %v95
    %212 = vmatpush.msra.mxu0 %v91
    %213 = vmatpush.msra.mxu0 %v87
    %214 = vmatpush.msra.mxu0 %v83
    %215 = vmatpush.msra.mxu0 %v79
    %216 = vmatmul.f32.gmra.mxu0 0.0
    %v217 = vpop.f32.mrf.mxu0
    %v218 = vadd.f32 0.0, %v217
    %219 = vdwg.mxu0
    %v220 = vadd.f32 %v72, %v158
    %v221 = vadd.f32 %v73, %v178
    %v222 = vadd.f32 %v74, %v198
    %v223 = vadd.f32 %v75, %v218
    %v224 = vxor.u32 %v220, 2147483648
    %v225 = vxor.u32 %v221, 2147483648
    %v226 = vxor.u32 %v222, 2147483648
    %v227 = vmul.f32 %v224, 1.442695
    %v228 = vpow.pop %v227
    %v229 = vmul.f32 %v225, 1.442695
    %v230 = vpow.pop %v229
    %v231 = vmul.f32 %v226, 1.442695
    %v232 = vpow.pop %v231
    %v233 = vadd.f32 %v228, 1.0
    %v234 = vadd.f32 %v230, 1.0
    %v235 = vadd.f32 %v232, 1.0
    %v236 = vrcp.pop %v233
    %v237 = vmul.f32 %v233, %v236
    %v238 = vsub.f32 1.0, %v237
    %v239 = vmul.f32 %v236, %v238
    %v240 = vadd.f32 %v236, %v239
    %vm241 = vweird.f32 %v233
    %vm242 = vweird.f32 %v236
    %vm243 = vmor %vm241, %vm242
    %v244 = vsel %vm243, %v236, %v240
    %v245 = vand.u32 2147483647, %v233
    %vm246 = vcmp.eq.f32.partialorder %v245, 8.507059e+37
    %v247 = vand.u32 %v233, 2147483648
    %v248 = vor.u32 1.1754944e-38, %v247
    %v249 = vsel %vm246, %v248, %v244
    %v250 = vmul.f32 1.0, %v249
    %v251 = vrcp.pop %v234
    %v252 = vmul.f32 %v234, %v251
    %v253 = vsub.f32 1.0, %v252
    %v254 = vmul.f32 %v251, %v253
    %v255 = vadd.f32 %v251, %v254
    %vm256 = vweird.f32 %v234
    %vm257 = vweird.f32 %v251
    %vm258 = vmor %vm256, %vm257
    %v259 = vsel %vm258, %v251, %v255
    %v260 = vand.u32 2147483647, %v234
    %vm261 = vcmp.eq.f32.partialorder %v260, 8.507059e+37
    %v262 = vand.u32 %v234, 2147483648
    %v263 = vor.u32 1.1754944e-38, %v262
    %v264 = vsel %vm261, %v263, %v259
    %v265 = vmul.f32 1.0, %v264
    %v266 = vrcp.pop %v235
    %v267 = vmul.f32 %v235, %v266
    %v268 = vsub.f32 1.0, %v267
    %v269 = vmul.f32 %v266, %v268
    %v270 = vadd.f32 %v266, %v269
    %vm271 = vweird.f32 %v235
    %vm272 = vweird.f32 %v266
    %vm273 = vmor %vm271, %vm272
    %v274 = vsel %vm273, %v266, %v270
    %v275 = vand.u32 2147483647, %v235
    %vm276 = vcmp.eq.f32.partialorder %v275, 8.507059e+37
    %v277 = vand.u32 %v235, 2147483648
    %v278 = vor.u32 1.1754944e-38, %v277
    %v279 = vsel %vm276, %v278, %v274
    %v280 = vmul.f32 1.0, %v279
    %v281 = vtanh.pop %v223
    %v282 = vmul.f32 %v265, 0.0
    %v283 = vmul.f32 %v250, %v281
    %v284 = vadd.f32 %v282, %v283
    %v285 = vtanh.pop %v284
    %v286 = vmul.f32 %v280, %v285
    %v287 = vlaneseq
    %v288 = vand.u32 %v287, 127
    %vm289 = vcmp.lt.s32.totalorder %v288, 64
    %v290 = vsel %vm289, %v286, 0.0
    %v291 = vsel %vm289, %v284, 0.0
    %s292 = scalar_lea.vmem %s0, 2
    %v293 = vld [vmem:[%s292] sm:$0x3]
    %295 = vset.pattern.permute.xlu0 0
    %296 = vperm.xlu0 %295, %v293
    %v297 = vpop.permute.xlu0 %296
    %v299 = vmul.f32 %v297, %v50
    %v300 = vmul.f32 %v297, %v51
    %v301 = vmul.f32 %v297, %v52
    %v302 = vmul.f32 %v297, %v53
    %v303 = vadd.f32 %v299, %v64
    %v304 = vadd.f32 %v300, %v65
    %v305 = vadd.f32 %v301, %v66
    %v306 = vadd.f32 %v302, %v67
    %307 = vmatpush.msra.mxu0 %v136
    %308 = vmatpush.msra.mxu0 %v132
    %309 = vmatpush.msra.mxu0 %v128
    %310 = vmatpush.msra.mxu0 %v124
    %311 = vmatpush.msra.mxu0 %v120
    %312 = vmatpush.msra.mxu0 %v116
    %313 = vmatpush.msra.mxu0 %v112
    %314 = vmatpush.msra.mxu0 %v108
    %315 = vmatpush.msra.mxu0 %v104
    %316 = vmatpush.msra.mxu0 %v100
    %317 = vmatpush.msra.mxu0 %v96
    %318 = vmatpush.msra.mxu0 %v92
    %319 = vmatpush.msra.mxu0 %v88
    %320 = vmatpush.msra.mxu0 %v84
    %321 = vmatpush.msra.mxu0 %v80
    %322 = vmatpush.msra.mxu0 %v76
    %323 = vmatmul.f32.gmra.mxu0 %v290
    %v324 = vpop.f32.mrf.mxu0
    %v325 = vadd.f32 0.0, %v324
    %326 = vdwg.mxu0
    %327 = vmatpush.msra.mxu0 %v137
    %328 = vmatpush.msra.mxu0 %v133
    %329 = vmatpush.msra.mxu0 %v129
    %330 = vmatpush.msra.mxu0 %v125
    %331 = vmatpush.msra.mxu0 %v121
    %332 = vmatpush.msra.mxu0 %v117
    %333 = vmatpush.msra.mxu0 %v113
    %334 = vmatpush.msra.mxu0 %v109
    %335 = vmatpush.msra.mxu0 %v105
    %336 = vmatpush.msra.mxu0 %v101
    %337 = vmatpush.msra.mxu0 %v97
    %338 = vmatpush.msra.mxu0 %v93
    %339 = vmatpush.msra.mxu0 %v89
    %340 = vmatpush.msra.mxu0 %v85
    %341 = vmatpush.msra.mxu0 %v81
    %342 = vmatpush.msra.mxu0 %v77
    %343 = vmatmul.f32.gmra.mxu0 %v290
    %v344 = vpop.f32.mrf.mxu0
    %v345 = vadd.f32 0.0, %v344
    %346 = vdwg.mxu0
    %347 = vmatpush.msra.mxu0 %v138
    %348 = vmatpush.msra.mxu0 %v134
    %349 = vmatpush.msra.mxu0 %v130
    %350 = vmatpush.msra.mxu0 %v126
    %351 = vmatpush.msra.mxu0 %v122
    %352 = vmatpush.msra.mxu0 %v118
    %353 = vmatpush.msra.mxu0 %v114
    %354 = vmatpush.msra.mxu0 %v110
    %355 = vmatpush.msra.mxu0 %v106
    %356 = vmatpush.msra.mxu0 %v102
    %357 = vmatpush.msra.mxu0 %v98
    %358 = vmatpush.msra.mxu0 %v94
    %359 = vmatpush.msra.mxu0 %v90
    %360 = vmatpush.msra.mxu0 %v86
    %361 = vmatpush.msra.mxu0 %v82
    %362 = vmatpush.msra.mxu0 %v78
    %363 = vmatmul.f32.gmra.mxu0 %v290
    %v364 = vpop.f32.mrf.mxu0
    %v365 = vadd.f32 0.0, %v364
    %366 = vdwg.mxu0
    %367 = vmatpush.msra.mxu0 %v139
    %368 = vmatpush.msra.mxu0 %v135
    %369 = vmatpush.msra.mxu0 %v131
    %370 = vmatpush.msra.mxu0 %v127
    %371 = vmatpush.msra.mxu0 %v123
    %372 = vmatpush.msra.mxu0 %v119
    %373 = vmatpush.msra.mxu0 %v115
    %374 = vmatpush.msra.mxu0 %v111
    %375 = vmatpush.msra.mxu0 %v107
    %376 = vmatpush.msra.mxu0 %v103
    %377 = vmatpush.msra.mxu0 %v99
    %378 = vmatpush.msra.mxu0 %v95
    %379 = vmatpush.msra.mxu0 %v91
    %380 = vmatpush.msra.mxu0 %v87
    %381 = vmatpush.msra.mxu0 %v83
    %382 = vmatpush.msra.mxu0 %v79
    %383 = vmatmul.f32.gmra.mxu0 %v290
    %v384 = vpop.f32.mrf.mxu0
    %v385 = vadd.f32 0.0, %v384
    %386 = vdwg.mxu0
    %v387 = vadd.f32 %v303, %v325
    %v388 = vadd.f32 %v304, %v345
    %v389 = vadd.f32 %v305, %v365
    %v390 = vadd.f32 %v306, %v385
    %v391 = vxor.u32 %v387, 2147483648
    %v392 = vxor.u32 %v388, 2147483648
    %v393 = vxor.u32 %v389, 2147483648
    %v394 = vmul.f32 %v391, 1.442695
    %v395 = vpow.pop %v394
    %v396 = vmul.f32 %v392, 1.442695
    %v397 = vpow.pop %v396
    %v398 = vmul.f32 %v393, 1.442695
    %v399 = vpow.pop %v398
    %v400 = vadd.f32 %v395, 1.0
    %v401 = vadd.f32 %v397, 1.0
    %v402 = vadd.f32 %v399, 1.0
    %v403 = vrcp.pop %v400
    %v404 = vmul.f32 %v400, %v403
    %v405 = vsub.f32 1.0, %v404
    %v406 = vmul.f32 %v403, %v405
    %v407 = vadd.f32 %v403, %v406
    %vm408 = vweird.f32 %v400
    %vm409 = vweird.f32 %v403
    %vm410 = vmor %vm408, %vm409
    %v411 = vsel %vm410, %v403, %v407
    %v412 = vand.u32 2147483647, %v400
    %vm413 = vcmp.eq.f32.partialorder %v412, 8.507059e+37
    %v414 = vand.u32 %v400, 2147483648
    %v415 = vor.u32 1.1754944e-38, %v414
    %v416 = vsel %vm413, %v415, %v411
    %v417 = vmul.f32 1.0, %v416
    %v418 = vrcp.pop %v401
    %v419 = vmul.f32 %v401, %v418
    %v420 = vsub.f32 1.0, %v419
    %v421 = vmul.f32 %v418, %v420
    %v422 = vadd.f32 %v418, %v421
    %vm423 = vweird.f32 %v401
    %vm424 = vweird.f32 %v418
    %vm425 = vmor %vm423, %vm424
    %v426 = vsel %vm425, %v418, %v422
    %v427 = vand.u32 2147483647, %v401
    %vm428 = vcmp.eq.f32.partialorder %v427, 8.507059e+37
    %v429 = vand.u32 %v401, 2147483648
    %v430 = vor.u32 1.1754944e-38, %v429
    %v431 = vsel %vm428, %v430, %v426
    %v432 = vmul.f32 1.0, %v431
    %v433 = vrcp.pop %v402
    %v434 = vmul.f32 %v402, %v433
    %v435 = vsub.f32 1.0, %v434
    %v436 = vmul.f32 %v433, %v435
    %v437 = vadd.f32 %v433, %v436
    %vm438 = vweird.f32 %v402
    %vm439 = vweird.f32 %v433
    %vm440 = vmor %vm438, %vm439
    %v441 = vsel %vm440, %v433, %v437
    %v442 = vand.u32 2147483647, %v402
    %vm443 = vcmp.eq.f32.partialorder %v442, 8.507059e+37
    %v444 = vand.u32 %v402, 2147483648
    %v445 = vor.u32 1.1754944e-38, %v444
    %v446 = vsel %vm443, %v445, %v441
    %v447 = vmul.f32 1.0, %v446
    %v448 = vtanh.pop %v390
    %v449 = vmul.f32 %v432, %v291
    %v450 = vmul.f32 %v417, %v448
    %v451 = vadd.f32 %v449, %v450
    %v452 = vtanh.pop %v451
    %v453 = vmul.f32 %v447, %v452
    %s454 = scalar_lea.vmem %s0, 4
    %v455 = vld [vmem:[%s454] sm:$0x3]
    %457 = vset.pattern.permute.xlu0 0
    %458 = vperm.xlu0 %457, %v455
    %v459 = vpop.permute.xlu0 %458
    %v461 = vmul.f32 %v459, %v50
    %v462 = vmul.f32 %v459, %v51
    %v463 = vmul.f32 %v459, %v52
    %v464 = vmul.f32 %v459, %v53
    %v465 = vadd.f32 %v461, %v64
    %v466 = vadd.f32 %v462, %v65
    %v467 = vadd.f32 %v463, %v66
    %v468 = vadd.f32 %v464, %v67
    %469 = vmatpush.msra.mxu0 %v136
    %470 = vmatpush.msra.mxu0 %v132
    %471 = vmatpush.msra.mxu0 %v128
    %472 = vmatpush.msra.mxu0 %v124
    %473 = vmatpush.msra.mxu0 %v120
    %474 = vmatpush.msra.mxu0 %v116
    %475 = vmatpush.msra.mxu0 %v112
    %476 = vmatpush.msra.mxu0 %v108
    %477 = vmatpush.msra.mxu0 %v104
    %478 = vmatpush.msra.mxu0 %v100
    %479 = vmatpush.msra.mxu0 %v96
    %480 = vmatpush.msra.mxu0 %v92
    %481 = vmatpush.msra.mxu0 %v88
    %482 = vmatpush.msra.mxu0 %v84
    %483 = vmatpush.msra.mxu0 %v80
    %484 = vmatpush.msra.mxu0 %v76
    %485 = vmatmul.f32.gmra.mxu0 %v453
    %v486 = vpop.f32.mrf.mxu0
    %v487 = vadd.f32 0.0, %v486
    %488 = vdwg.mxu0
    %489 = vmatpush.msra.mxu0 %v137
    %490 = vmatpush.msra.mxu0 %v133
    %491 = vmatpush.msra.mxu0 %v129
    %492 = vmatpush.msra.mxu0 %v125
    %493 = vmatpush.msra.mxu0 %v121
    %494 = vmatpush.msra.mxu0 %v117
    %495 = vmatpush.msra.mxu0 %v113
    %496 = vmatpush.msra.mxu0 %v109
    %497 = vmatpush.msra.mxu0 %v105
    %498 = vmatpush.msra.mxu0 %v101
    %499 = vmatpush.msra.mxu0 %v97
    %500 = vmatpush.msra.mxu0 %v93
    %501 = vmatpush.msra.mxu0 %v89
    %502 = vmatpush.msra.mxu0 %v85
    %503 = vmatpush.msra.mxu0 %v81
    %504 = vmatpush.msra.mxu0 %v77
    %505 = vmatmul.f32.gmra.mxu0 %v453
    %v506 = vpop.f32.mrf.mxu0
    %v507 = vadd.f32 0.0, %v506
    %508 = vdwg.mxu0
    %509 = vmatpush.msra.mxu0 %v138
    %510 = vmatpush.msra.mxu0 %v134
    %511 = vmatpush.msra.mxu0 %v130
    %512 = vmatpush.msra.mxu0 %v126
    %513 = vmatpush.msra.mxu0 %v122
    %514 = vmatpush.msra.mxu0 %v118
    %515 = vmatpush.msra.mxu0 %v114
    %516 = vmatpush.msra.mxu0 %v110
    %517 = vmatpush.msra.mxu0 %v106
    %518 = vmatpush.msra.mxu0 %v102
    %519 = vmatpush.msra.mxu0 %v98
    %520 = vmatpush.msra.mxu0 %v94
    %521 = vmatpush.msra.mxu0 %v90
    %522 = vmatpush.msra.mxu0 %v86
    %523 = vmatpush.msra.mxu0 %v82
    %524 = vmatpush.msra.mxu0 %v78
    %525 = vmatmul.f32.gmra.mxu0 %v453
    %v526 = vpop.f32.mrf.mxu0
    %v527 = vadd.f32 0.0, %v526
    %528 = vdwg.mxu0
    %529 = vmatpush.msra.mxu0 %v139
    %530 = vmatpush.msra.mxu0 %v135
    %531 = vmatpush.msra.mxu0 %v131
    %532 = vmatpush.msra.mxu0 %v127
    %533 = vmatpush.msra.mxu0 %v123
    %534 = vmatpush.msra.mxu0 %v119
    %535 = vmatpush.msra.mxu0 %v115
    %536 = vmatpush.msra.mxu0 %v111
    %537 = vmatpush.msra.mxu0 %v107
    %538 = vmatpush.msra.mxu0 %v103
    %539 = vmatpush.msra.mxu0 %v99
    %540 = vmatpush.msra.mxu0 %v95
    %541 = vmatpush.msra.mxu0 %v91
    %542 = vmatpush.msra.mxu0 %v87
    %543 = vmatpush.msra.mxu0 %v83
    %544 = vmatpush.msra.mxu0 %v79
    %545 = vmatmul.f32.gmra.mxu0 %v453
    %v546 = vpop.f32.mrf.mxu0
    %v547 = vadd.f32 0.0, %v546
    %548 = vdwg.mxu0
    %v549 = vadd.f32 %v465, %v487
    %v550 = vadd.f32 %v466, %v507
    %v551 = vadd.f32 %v467, %v527
    %v552 = vadd.f32 %v468, %v547
    %v553 = vxor.u32 %v549, 2147483648
    %v554 = vxor.u32 %v550, 2147483648
    %v555 = vxor.u32 %v551, 2147483648
    %v556 = vmul.f32 %v553, 1.442695
    %v557 = vpow.pop %v556
    %v558 = vmul.f32 %v554, 1.442695
    %v559 = vpow.pop %v558
    %v560 = vmul.f32 %v555, 1.442695
    %v561 = vpow.pop %v560
    %v562 = vadd.f32 %v557, 1.0
    %v563 = vadd.f32 %v559, 1.0
    %v564 = vadd.f32 %v561, 1.0
    %v565 = vrcp.pop %v562
    %v566 = vmul.f32 %v562, %v565
    %v567 = vsub.f32 1.0, %v566
    %v568 = vmul.f32 %v565, %v567
    %v569 = vadd.f32 %v565, %v568
    %vm570 = vweird.f32 %v562
    %vm571 = vweird.f32 %v565
    %vm572 = vmor %vm570, %vm571
    %v573 = vsel %vm572, %v565, %v569
    %v574 = vand.u32 2147483647, %v562
    %vm575 = vcmp.eq.f32.partialorder %v574, 8.507059e+37
    %v576 = vand.u32 %v562, 2147483648
    %v577 = vor.u32 1.1754944e-38, %v576
    %v578 = vsel %vm575, %v577, %v573
    %v579 = vmul.f32 1.0, %v578
    %v580 = vrcp.pop %v563
    %v581 = vmul.f32 %v563, %v580
    %v582 = vsub.f32 1.0, %v581
    %v583 = vmul.f32 %v580, %v582
    %v584 = vadd.f32 %v580, %v583
    %vm585 = vweird.f32 %v563
    %vm586 = vweird.f32 %v580
    %vm587 = vmor %vm585, %vm586
    %v588 = vsel %vm587, %v580, %v584
    %v589 = vand.u32 2147483647, %v563
    %vm590 = vcmp.eq.f32.partialorder %v589, 8.507059e+37
    %v591 = vand.u32 %v563, 2147483648
    %v592 = vor.u32 1.1754944e-38, %v591
    %v593 = vsel %vm590, %v592, %v588
    %v594 = vmul.f32 1.0, %v593
    %v595 = vrcp.pop %v564
    %v596 = vmul.f32 %v564, %v595
    %v597 = vsub.f32 1.0, %v596
    %v598 = vmul.f32 %v595, %v597
    %v599 = vadd.f32 %v595, %v598
    %vm600 = vweird.f32 %v564
    %vm601 = vweird.f32 %v595
    %vm602 = vmor %vm600, %vm601
    %v603 = vsel %vm602, %v595, %v599
    %v604 = vand.u32 2147483647, %v564
    %vm605 = vcmp.eq.f32.partialorder %v604, 8.507059e+37
    %v606 = vand.u32 %v564, 2147483648
    %v607 = vor.u32 1.1754944e-38, %v606
    %v608 = vsel %vm605, %v607, %v603
    %v609 = vmul.f32 1.0, %v608
    %v610 = vtanh.pop %v552
    %v611 = vmul.f32 %v594, %v451
    %v612 = vmul.f32 %v579, %v610
    %v613 = vadd.f32 %v611, %v612
    %v614 = vtanh.pop %v613
    %v615 = vmul.f32 %v609, %v614
    %s616 = scalar_lea.vmem %s0, 6
    %v617 = vld [vmem:[%s616] sm:$0x3]
    %619 = vset.pattern.permute.xlu0 0
    %620 = vperm.xlu0 %619, %v617
    %v621 = vpop.permute.xlu0 %620
    %v623 = vmul.f32 %v621, %v50
    %v624 = vmul.f32 %v621, %v51
    %v625 = vmul.f32 %v621, %v52
    %v626 = vmul.f32 %v621, %v53
    %v627 = vadd.f32 %v623, %v64
    %v628 = vadd.f32 %v624, %v65
    %v629 = vadd.f32 %v625, %v66
    %v630 = vadd.f32 %v626, %v67
    %631 = vmatpush.msra.mxu0 %v136
    %632 = vmatpush.msra.mxu0 %v132
    %633 = vmatpush.msra.mxu0 %v128
    %634 = vmatpush.msra.mxu0 %v124
    %635 = vmatpush.msra.mxu0 %v120
    %636 = vmatpush.msra.mxu0 %v116
    %637 = vmatpush.msra.mxu0 %v112
    %638 = vmatpush.msra.mxu0 %v108
    %639 = vmatpush.msra.mxu0 %v104
    %640 = vmatpush.msra.mxu0 %v100
    %641 = vmatpush.msra.mxu0 %v96
    %642 = vmatpush.msra.mxu0 %v92
    %643 = vmatpush.msra.mxu0 %v88
    %644 = vmatpush.msra.mxu0 %v84
    %645 = vmatpush.msra.mxu0 %v80
    %646 = vmatpush.msra.mxu0 %v76
    %647 = vmatmul.f32.gmra.mxu0 %v615
    %v648 = vpop.f32.mrf.mxu0
    %v649 = vadd.f32 0.0, %v648
    %650 = vdwg.mxu0
    %651 = vmatpush.msra.mxu0 %v137
    %652 = vmatpush.msra.mxu0 %v133
    %653 = vmatpush.msra.mxu0 %v129
    %654 = vmatpush.msra.mxu0 %v125
    %655 = vmatpush.msra.mxu0 %v121
    %656 = vmatpush.msra.mxu0 %v117
    %657 = vmatpush.msra.mxu0 %v113
    %658 = vmatpush.msra.mxu0 %v109
    %659 = vmatpush.msra.mxu0 %v105
    %660 = vmatpush.msra.mxu0 %v101
    %661 = vmatpush.msra.mxu0 %v97
    %662 = vmatpush.msra.mxu0 %v93
    %663 = vmatpush.msra.mxu0 %v89
    %664 = vmatpush.msra.mxu0 %v85
    %665 = vmatpush.msra.mxu0 %v81
    %666 = vmatpush.msra.mxu0 %v77
    %667 = vmatmul.f32.gmra.mxu0 %v615
    %v668 = vpop.f32.mrf.mxu0
    %v669 = vadd.f32 0.0, %v668
    %670 = vdwg.mxu0
    %671 = vmatpush.msra.mxu0 %v138
    %672 = vmatpush.msra.mxu0 %v134
    %673 = vmatpush.msra.mxu0 %v130
    %674 = vmatpush.msra.mxu0 %v126
    %675 = vmatpush.msra.mxu0 %v122
    %676 = vmatpush.msra.mxu0 %v118
    %677 = vmatpush.msra.mxu0 %v114
    %678 = vmatpush.msra.mxu0 %v110
    %679 = vmatpush.msra.mxu0 %v106
    %680 = vmatpush.msra.mxu0 %v102
    %681 = vmatpush.msra.mxu0 %v98
    %682 = vmatpush.msra.mxu0 %v94
    %683 = vmatpush.msra.mxu0 %v90
    %684 = vmatpush.msra.mxu0 %v86
    %685 = vmatpush.msra.mxu0 %v82
    %686 = vmatpush.msra.mxu0 %v78
    %687 = vmatmul.f32.gmra.mxu0 %v615
    %v688 = vpop.f32.mrf.mxu0
    %v689 = vadd.f32 0.0, %v688
    %690 = vdwg.mxu0
    %691 = vmatpush.msra.mxu0 %v139
    %692 = vmatpush.msra.mxu0 %v135
    %693 = vmatpush.msra.mxu0 %v131
    %694 = vmatpush.msra.mxu0 %v127
    %695 = vmatpush.msra.mxu0 %v123
    %696 = vmatpush.msra.mxu0 %v119
    %697 = vmatpush.msra.mxu0 %v115
    %698 = vmatpush.msra.mxu0 %v111
    %699 = vmatpush.msra.mxu0 %v107
    %700 = vmatpush.msra.mxu0 %v103
    %701 = vmatpush.msra.mxu0 %v99
    %702 = vmatpush.msra.mxu0 %v95
    %703 = vmatpush.msra.mxu0 %v91
    %704 = vmatpush.msra.mxu0 %v87
    %705 = vmatpush.msra.mxu0 %v83
    %706 = vmatpush.msra.mxu0 %v79
    %707 = vmatmul.f32.gmra.mxu0 %v615
    %v708 = vpop.f32.mrf.mxu0
    %v709 = vadd.f32 0.0, %v708
    %710 = vdwg.mxu0
    %v711 = vadd.f32 %v627, %v649
    %v712 = vadd.f32 %v628, %v669
    %v713 = vadd.f32 %v629, %v689
    %v714 = vadd.f32 %v630, %v709
    %v715 = vxor.u32 %v711, 2147483648
    %v716 = vxor.u32 %v712, 2147483648
    %v717 = vxor.u32 %v713, 2147483648
    %v718 = vmul.f32 %v715, 1.442695
    %v719 = vpow.pop %v718
    %v720 = vmul.f32 %v716, 1.442695
    %v721 = vpow.pop %v720
    %v722 = vmul.f32 %v717, 1.442695
    %v723 = vpow.pop %v722
    %v724 = vadd.f32 %v719, 1.0
    %v725 = vadd.f32 %v721, 1.0
    %v726 = vadd.f32 %v723, 1.0
    %v727 = vrcp.pop %v724
    %v728 = vmul.f32 %v724, %v727
    %v729 = vsub.f32 1.0, %v728
    %v730 = vmul.f32 %v727, %v729
    %v731 = vadd.f32 %v727, %v730
    %vm732 = vweird.f32 %v724
    %vm733 = vweird.f32 %v727
    %vm734 = vmor %vm732, %vm733
    %v735 = vsel %vm734, %v727, %v731
    %v736 = vand.u32 2147483647, %v724
    %vm737 = vcmp.eq.f32.partialorder %v736, 8.507059e+37
    %v738 = vand.u32 %v724, 2147483648
    %v739 = vor.u32 1.1754944e-38, %v738
    %v740 = vsel %vm737, %v739, %v735
    %v741 = vmul.f32 1.0, %v740
    %v742 = vrcp.pop %v725
    %v743 = vmul.f32 %v725, %v742
    %v744 = vsub.f32 1.0, %v743
    %v745 = vmul.f32 %v742, %v744
    %v746 = vadd.f32 %v742, %v745
    %vm747 = vweird.f32 %v725
    %vm748 = vweird.f32 %v742
    %vm749 = vmor %vm747, %vm748
    %v750 = vsel %vm749, %v742, %v746
    %v751 = vand.u32 2147483647, %v725
    %vm752 = vcmp.eq.f32.partialorder %v751, 8.507059e+37
    %v753 = vand.u32 %v725, 2147483648
    %v754 = vor.u32 1.1754944e-38, %v753
    %v755 = vsel %vm752, %v754, %v750
    %v756 = vmul.f32 1.0, %v755
    %v757 = vrcp.pop %v726
    %v758 = vmul.f32 %v726, %v757
    %v759 = vsub.f32 1.0, %v758
    %v760 = vmul.f32 %v757, %v759
    %v761 = vadd.f32 %v757, %v760
    %vm762 = vweird.f32 %v726
    %vm763 = vweird.f32 %v757
    %vm764 = vmor %vm762, %vm763
    %v765 = vsel %vm764, %v757, %v761
    %v766 = vand.u32 2147483647, %v726
    %vm767 = vcmp.eq.f32.partialorder %v766, 8.507059e+37
    %v768 = vand.u32 %v726, 2147483648
    %v769 = vor.u32 1.1754944e-38, %v768
    %v770 = vsel %vm767, %v769, %v765
    %v771 = vmul.f32 1.0, %v770
    %v772 = vtanh.pop %v714
    %v773 = vmul.f32 %v756, %v613
    %v774 = vmul.f32 %v741, %v772
    %v775 = vadd.f32 %v773, %v774
    %v776 = vtanh.pop %v775
    %v777 = vmul.f32 %v771, %v776
    %s778 = scalar_lea.vmem %s0, 8
    %v779 = vld [vmem:[%s778] sm:$0x3]
    %781 = vset.pattern.permute.xlu0 0
    %782 = vperm.xlu0 %781, %v779
    %v783 = vpop.permute.xlu0 %782
    %v785 = vmul.f32 %v783, %v50
    %v786 = vmul.f32 %v783, %v51
    %v787 = vmul.f32 %v783, %v52
    %v788 = vmul.f32 %v783, %v53
    %v789 = vadd.f32 %v785, %v64
    %v790 = vadd.f32 %v786, %v65
    %v791 = vadd.f32 %v787, %v66
    %v792 = vadd.f32 %v788, %v67
    %793 = vmatpush.msra.mxu0 %v136
    %794 = vmatpush.msra.mxu0 %v132
    %795 = vmatpush.msra.mxu0 %v128
    %796 = vmatpush.msra.mxu0 %v124
    %797 = vmatpush.msra.mxu0 %v120
    %798 = vmatpush.msra.mxu0 %v116
    %799 = vmatpush.msra.mxu0 %v112
    %800 = vmatpush.msra.mxu0 %v108
    %801 = vmatpush.msra.mxu0 %v104
    %802 = vmatpush.msra.mxu0 %v100
    %803 = vmatpush.msra.mxu0 %v96
    %804 = vmatpush.msra.mxu0 %v92
    %805 = vmatpush.msra.mxu0 %v88
    %806 = vmatpush.msra.mxu0 %v84
    %807 = vmatpush.msra.mxu0 %v80
    %808 = vmatpush.msra.mxu0 %v76
    %809 = vmatmul.f32.gmra.mxu0 %v777
    %v810 = vpop.f32.mrf.mxu0
    %v811 = vadd.f32 0.0, %v810
    %812 = vdwg.mxu0
    %813 = vmatpush.msra.mxu0 %v137
    %814 = vmatpush.msra.mxu0 %v133
    %815 = vmatpush.msra.mxu0 %v129
    %816 = vmatpush.msra.mxu0 %v125
    %817 = vmatpush.msra.mxu0 %v121
    %818 = vmatpush.msra.mxu0 %v117
    %819 = vmatpush.msra.mxu0 %v113
    %820 = vmatpush.msra.mxu0 %v109
    %821 = vmatpush.msra.mxu0 %v105
    %822 = vmatpush.msra.mxu0 %v101
    %823 = vmatpush.msra.mxu0 %v97
    %824 = vmatpush.msra.mxu0 %v93
    %825 = vmatpush.msra.mxu0 %v89
    %826 = vmatpush.msra.mxu0 %v85
    %827 = vmatpush.msra.mxu0 %v81
    %828 = vmatpush.msra.mxu0 %v77
    %829 = vmatmul.f32.gmra.mxu0 %v777
    %v830 = vpop.f32.mrf.mxu0
    %v831 = vadd.f32 0.0, %v830
    %832 = vdwg.mxu0
    %833 = vmatpush.msra.mxu0 %v138
    %834 = vmatpush.msra.mxu0 %v134
    %835 = vmatpush.msra.mxu0 %v130
    %836 = vmatpush.msra.mxu0 %v126
    %837 = vmatpush.msra.mxu0 %v122
    %838 = vmatpush.msra.mxu0 %v118
    %839 = vmatpush.msra.mxu0 %v114
    %840 = vmatpush.msra.mxu0 %v110
    %841 = vmatpush.msra.mxu0 %v106
    %842 = vmatpush.msra.mxu0 %v102
    %843 = vmatpush.msra.mxu0 %v98
    %844 = vmatpush.msra.mxu0 %v94
    %845 = vmatpush.msra.mxu0 %v90
    %846 = vmatpush.msra.mxu0 %v86
    %847 = vmatpush.msra.mxu0 %v82
    %848 = vmatpush.msra.mxu0 %v78
    %849 = vmatmul.f32.gmra.mxu0 %v777
    %v850 = vpop.f32.mrf.mxu0
    %v851 = vadd.f32 0.0, %v850
    %852 = vdwg.mxu0
    %853 = vmatpush.msra.mxu0 %v139
    %854 = vmatpush.msra.mxu0 %v135
    %855 = vmatpush.msra.mxu0 %v131
    %856 = vmatpush.msra.mxu0 %v127
    %857 = vmatpush.msra.mxu0 %v123
    %858 = vmatpush.msra.mxu0 %v119
    %859 = vmatpush.msra.mxu0 %v115
    %860 = vmatpush.msra.mxu0 %v111
    %861 = vmatpush.msra.mxu0 %v107
    %862 = vmatpush.msra.mxu0 %v103
    %863 = vmatpush.msra.mxu0 %v99
    %864 = vmatpush.msra.mxu0 %v95
    %865 = vmatpush.msra.mxu0 %v91
    %866 = vmatpush.msra.mxu0 %v87
    %867 = vmatpush.msra.mxu0 %v83
    %868 = vmatpush.msra.mxu0 %v79
    %869 = vmatmul.f32.gmra.mxu0 %v777
    %v870 = vpop.f32.mrf.mxu0
    %v871 = vadd.f32 0.0, %v870
    %872 = vdwg.mxu0
    %v873 = vadd.f32 %v789, %v811
    %v874 = vadd.f32 %v790, %v831
    %v875 = vadd.f32 %v791, %v851
    %v876 = vadd.f32 %v792, %v871
    %v877 = vxor.u32 %v873, 2147483648
    %v878 = vxor.u32 %v874, 2147483648
    %v879 = vxor.u32 %v875, 2147483648
    %v880 = vmul.f32 %v877, 1.442695
    %v881 = vpow.pop %v880
    %v882 = vmul.f32 %v878, 1.442695
    %v883 = vpow.pop %v882
    %v884 = vmul.f32 %v879, 1.442695
    %v885 = vpow.pop %v884
    %v886 = vadd.f32 %v881, 1.0
    %v887 = vadd.f32 %v883, 1.0
    %v888 = vadd.f32 %v885, 1.0
    %v889 = vrcp.pop %v886
    %v890 = vmul.f32 %v886, %v889
    %v891 = vsub.f32 1.0, %v890
    %v892 = vmul.f32 %v889, %v891
    %v893 = vadd.f32 %v889, %v892
    %vm894 = vweird.f32 %v886
    %vm895 = vweird.f32 %v889
    %vm896 = vmor %vm894, %vm895
    %v897 = vsel %vm896, %v889, %v893
    %v898 = vand.u32 2147483647, %v886
    %vm899 = vcmp.eq.f32.partialorder %v898, 8.507059e+37
    %v900 = vand.u32 %v886, 2147483648
    %v901 = vor.u32 1.1754944e-38, %v900
    %v902 = vsel %vm899, %v901, %v897
    %v903 = vmul.f32 1.0, %v902
    %v904 = vrcp.pop %v887
    %v905 = vmul.f32 %v887, %v904
    %v906 = vsub.f32 1.0, %v905
    %v907 = vmul.f32 %v904, %v906
    %v908 = vadd.f32 %v904, %v907
    %vm909 = vweird.f32 %v887
    %vm910 = vweird.f32 %v904
    %vm911 = vmor %vm909, %vm910
    %v912 = vsel %vm911, %v904, %v908
    %v913 = vand.u32 2147483647, %v887
    %vm914 = vcmp.eq.f32.partialorder %v913, 8.507059e+37
    %v915 = vand.u32 %v887, 2147483648
    %v916 = vor.u32 1.1754944e-38, %v915
    %v917 = vsel %vm914, %v916, %v912
    %v918 = vmul.f32 1.0, %v917
    %v919 = vrcp.pop %v888
    %v920 = vmul.f32 %v888, %v919
    %v921 = vsub.f32 1.0, %v920
    %v922 = vmul.f32 %v919, %v921
    %v923 = vadd.f32 %v919, %v922
    %vm924 = vweird.f32 %v888
    %vm925 = vweird.f32 %v919
    %vm926 = vmor %vm924, %vm925
    %v927 = vsel %vm926, %v919, %v923
    %v928 = vand.u32 2147483647, %v888
    %vm929 = vcmp.eq.f32.partialorder %v928, 8.507059e+37
    %v930 = vand.u32 %v888, 2147483648
    %v931 = vor.u32 1.1754944e-38, %v930
    %v932 = vsel %vm929, %v931, %v927
    %v933 = vmul.f32 1.0, %v932
    %v934 = vtanh.pop %v876
    %v935 = vmul.f32 %v918, %v775
    %v936 = vmul.f32 %v903, %v934
    %v937 = vadd.f32 %v935, %v936
    %v938 = vtanh.pop %v937
    %v939 = vmul.f32 %v933, %v938
    %s940 = scalar_lea.vmem %s0, 10
    %v941 = vld [vmem:[%s940] sm:$0x3]
    %943 = vset.pattern.permute.xlu0 0
    %944 = vperm.xlu0 %943, %v941
    %v945 = vpop.permute.xlu0 %944
    %v947 = vmul.f32 %v945, %v50
    %v948 = vmul.f32 %v945, %v51
    %v949 = vmul.f32 %v945, %v52
    %v950 = vmul.f32 %v945, %v53
    %v951 = vadd.f32 %v947, %v64
    %v952 = vadd.f32 %v948, %v65
    %v953 = vadd.f32 %v949, %v66
    %v954 = vadd.f32 %v950, %v67
    %955 = vmatpush.msra.mxu0 %v136
    %956 = vmatpush.msra.mxu0 %v132
    %957 = vmatpush.msra.mxu0 %v128
    %958 = vmatpush.msra.mxu0 %v124
    %959 = vmatpush.msra.mxu0 %v120
    %960 = vmatpush.msra.mxu0 %v116
    %961 = vmatpush.msra.mxu0 %v112
    %962 = vmatpush.msra.mxu0 %v108
    %963 = vmatpush.msra.mxu0 %v104
    %964 = vmatpush.msra.mxu0 %v100
    %965 = vmatpush.msra.mxu0 %v96
    %966 = vmatpush.msra.mxu0 %v92
    %967 = vmatpush.msra.mxu0 %v88
    %968 = vmatpush.msra.mxu0 %v84
    %969 = vmatpush.msra.mxu0 %v80
    %970 = vmatpush.msra.mxu0 %v76
    %971 = vmatmul.f32.gmra.mxu0 %v939
    %v972 = vpop.f32.mrf.mxu0
    %v973 = vadd.f32 0.0, %v972
    %974 = vdwg.mxu0
    %975 = vmatpush.msra.mxu0 %v137
    %976 = vmatpush.msra.mxu0 %v133
    %977 = vmatpush.msra.mxu0 %v129
    %978 = vmatpush.msra.mxu0 %v125
    %979 = vmatpush.msra.mxu0 %v121
    %980 = vmatpush.msra.mxu0 %v117
    %981 = vmatpush.msra.mxu0 %v113
    %982 = vmatpush.msra.mxu0 %v109
    %983 = vmatpush.msra.mxu0 %v105
    %984 = vmatpush.msra.mxu0 %v101
    %985 = vmatpush.msra.mxu0 %v97
    %986 = vmatpush.msra.mxu0 %v93
    %987 = vmatpush.msra.mxu0 %v89
    %988 = vmatpush.msra.mxu0 %v85
    %989 = vmatpush.msra.mxu0 %v81
    %990 = vmatpush.msra.mxu0 %v77
    %991 = vmatmul.f32.gmra.mxu0 %v939
    %v992 = vpop.f32.mrf.mxu0
    %v993 = vadd.f32 0.0, %v992
    %994 = vdwg.mxu0
    %995 = vmatpush.msra.mxu0 %v138
    %996 = vmatpush.msra.mxu0 %v134
    %997 = vmatpush.msra.mxu0 %v130
    %998 = vmatpush.msra.mxu0 %v126
    %999 = vmatpush.msra.mxu0 %v122
    %1000 = vmatpush.msra.mxu0 %v118
    %1001 = vmatpush.msra.mxu0 %v114
    %1002 = vmatpush.msra.mxu0 %v110
    %1003 = vmatpush.msra.mxu0 %v106
    %1004 = vmatpush.msra.mxu0 %v102
    %1005 = vmatpush.msra.mxu0 %v98
    %1006 = vmatpush.msra.mxu0 %v94
    %1007 = vmatpush.msra.mxu0 %v90
    %1008 = vmatpush.msra.mxu0 %v86
    %1009 = vmatpush.msra.mxu0 %v82
    %1010 = vmatpush.msra.mxu0 %v78
    %1011 = vmatmul.f32.gmra.mxu0 %v939
    %v1012 = vpop.f32.mrf.mxu0
    %v1013 = vadd.f32 0.0, %v1012
    %1014 = vdwg.mxu0
    %1015 = vmatpush.msra.mxu0 %v139
    %1016 = vmatpush.msra.mxu0 %v135
    %1017 = vmatpush.msra.mxu0 %v131
    %1018 = vmatpush.msra.mxu0 %v127
    %1019 = vmatpush.msra.mxu0 %v123
    %1020 = vmatpush.msra.mxu0 %v119
    %1021 = vmatpush.msra.mxu0 %v115
    %1022 = vmatpush.msra.mxu0 %v111
    %1023 = vmatpush.msra.mxu0 %v107
    %1024 = vmatpush.msra.mxu0 %v103
    %1025 = vmatpush.msra.mxu0 %v99
    %1026 = vmatpush.msra.mxu0 %v95
    %1027 = vmatpush.msra.mxu0 %v91
    %1028 = vmatpush.msra.mxu0 %v87
    %1029 = vmatpush.msra.mxu0 %v83
    %1030 = vmatpush.msra.mxu0 %v79
    %1031 = vmatmul.f32.gmra.mxu0 %v939
    %v1032 = vpop.f32.mrf.mxu0
    %v1033 = vadd.f32 0.0, %v1032
    %1034 = vdwg.mxu0
    %v1035 = vadd.f32 %v951, %v973
    %v1036 = vadd.f32 %v952, %v993
    %v1037 = vadd.f32 %v953, %v1013
    %v1038 = vadd.f32 %v954, %v1033
    %v1039 = vxor.u32 %v1035, 2147483648
    %v1040 = vxor.u32 %v1036, 2147483648
    %v1041 = vxor.u32 %v1037, 2147483648
    %v1042 = vmul.f32 %v1039, 1.442695
    %v1043 = vpow.pop %v1042
    %v1044 = vmul.f32 %v1040, 1.442695
    %v1045 = vpow.pop %v1044
    %v1046 = vmul.f32 %v1041, 1.442695
    %v1047 = vpow.pop %v1046
    %v1048 = vadd.f32 %v1043, 1.0
    %v1049 = vadd.f32 %v1045, 1.0
    %v1050 = vadd.f32 %v1047, 1.0
    %v1051 = vrcp.pop %v1048
    %v1052 = vmul.f32 %v1048, %v1051
    %v1053 = vsub.f32 1.0, %v1052
    %v1054 = vmul.f32 %v1051, %v1053
    %v1055 = vadd.f32 %v1051, %v1054
    %vm1056 = vweird.f32 %v1048
    %vm1057 = vweird.f32 %v1051
    %vm1058 = vmor %vm1056, %vm1057
    %v1059 = vsel %vm1058, %v1051, %v1055
    %v1060 = vand.u32 2147483647, %v1048
    %vm1061 = vcmp.eq.f32.partialorder %v1060, 8.507059e+37
    %v1062 = vand.u32 %v1048, 2147483648
    %v1063 = vor.u32 1.1754944e-38, %v1062
    %v1064 = vsel %vm1061, %v1063, %v1059
    %v1065 = vmul.f32 1.0, %v1064
    %v1066 = vrcp.pop %v1049
    %v1067 = vmul.f32 %v1049, %v1066
    %v1068 = vsub.f32 1.0, %v1067
    %v1069 = vmul.f32 %v1066, %v1068
    %v1070 = vadd.f32 %v1066, %v1069
    %vm1071 = vweird.f32 %v1049
    %vm1072 = vweird.f32 %v1066
    %vm1073 = vmor %vm1071, %vm1072
    %v1074 = vsel %vm1073, %v1066, %v1070
    %v1075 = vand.u32 2147483647, %v1049
    %vm1076 = vcmp.eq.f32.partialorder %v1075, 8.507059e+37
    %v1077 = vand.u32 %v1049, 2147483648
    %v1078 = vor.u32 1.1754944e-38, %v1077
    %v1079 = vsel %vm1076, %v1078, %v1074
    %v1080 = vmul.f32 1.0, %v1079
    %v1081 = vrcp.pop %v1050
    %v1082 = vmul.f32 %v1050, %v1081
    %v1083 = vsub.f32 1.0, %v1082
    %v1084 = vmul.f32 %v1081, %v1083
    %v1085 = vadd.f32 %v1081, %v1084
    %vm1086 = vweird.f32 %v1050
    %vm1087 = vweird.f32 %v1081
    %vm1088 = vmor %vm1086, %vm1087
    %v1089 = vsel %vm1088, %v1081, %v1085
    %v1090 = vand.u32 2147483647, %v1050
    %vm1091 = vcmp.eq.f32.partialorder %v1090, 8.507059e+37
    %v1092 = vand.u32 %v1050, 2147483648
    %v1093 = vor.u32 1.1754944e-38, %v1092
    %v1094 = vsel %vm1091, %v1093, %v1089
    %v1095 = vmul.f32 1.0, %v1094
    %v1096 = vtanh.pop %v1038
    %v1097 = vmul.f32 %v1080, %v937
    %v1098 = vmul.f32 %v1065, %v1096
    %v1099 = vadd.f32 %v1097, %v1098
    %v1100 = vtanh.pop %v1099
    %v1101 = vmul.f32 %v1095, %v1100
    %s1102 = scalar_lea.vmem %s0, 12
    %v1103 = vld [vmem:[%s1102] sm:$0x3]
    %1105 = vset.pattern.permute.xlu0 0
    %1106 = vperm.xlu0 %1105, %v1103
    %v1107 = vpop.permute.xlu0 %1106
    %v1109 = vmul.f32 %v1107, %v50
    %v1110 = vmul.f32 %v1107, %v51
    %v1111 = vmul.f32 %v1107, %v52
    %v1112 = vmul.f32 %v1107, %v53
    %v1113 = vadd.f32 %v1109, %v64
    %v1114 = vadd.f32 %v1110, %v65
    %v1115 = vadd.f32 %v1111, %v66
    %v1116 = vadd.f32 %v1112, %v67
    %1117 = vmatpush.msra.mxu0 %v136
    %1118 = vmatpush.msra.mxu0 %v132
    %1119 = vmatpush.msra.mxu0 %v128
    %1120 = vmatpush.msra.mxu0 %v124
    %1121 = vmatpush.msra.mxu0 %v120
    %1122 = vmatpush.msra.mxu0 %v116
    %1123 = vmatpush.msra.mxu0 %v112
    %1124 = vmatpush.msra.mxu0 %v108
    %1125 = vmatpush.msra.mxu0 %v104
    %1126 = vmatpush.msra.mxu0 %v100
    %1127 = vmatpush.msra.mxu0 %v96
    %1128 = vmatpush.msra.mxu0 %v92
    %1129 = vmatpush.msra.mxu0 %v88
    %1130 = vmatpush.msra.mxu0 %v84
    %1131 = vmatpush.msra.mxu0 %v80
    %1132 = vmatpush.msra.mxu0 %v76
    %1133 = vmatmul.f32.gmra.mxu0 %v1101
    %v1134 = vpop.f32.mrf.mxu0
    %v1135 = vadd.f32 0.0, %v1134
    %1136 = vdwg.mxu0
    %1137 = vmatpush.msra.mxu0 %v137
    %1138 = vmatpush.msra.mxu0 %v133
    %1139 = vmatpush.msra.mxu0 %v129
    %1140 = vmatpush.msra.mxu0 %v125
    %1141 = vmatpush.msra.mxu0 %v121
    %1142 = vmatpush.msra.mxu0 %v117
    %1143 = vmatpush.msra.mxu0 %v113
    %1144 = vmatpush.msra.mxu0 %v109
    %1145 = vmatpush.msra.mxu0 %v105
    %1146 = vmatpush.msra.mxu0 %v101
    %1147 = vmatpush.msra.mxu0 %v97
    %1148 = vmatpush.msra.mxu0 %v93
    %1149 = vmatpush.msra.mxu0 %v89
    %1150 = vmatpush.msra.mxu0 %v85
    %1151 = vmatpush.msra.mxu0 %v81
    %1152 = vmatpush.msra.mxu0 %v77
    %1153 = vmatmul.f32.gmra.mxu0 %v1101
    %v1154 = vpop.f32.mrf.mxu0
    %v1155 = vadd.f32 0.0, %v1154
    %1156 = vdwg.mxu0
    %1157 = vmatpush.msra.mxu0 %v138
    %1158 = vmatpush.msra.mxu0 %v134
    %1159 = vmatpush.msra.mxu0 %v130
    %1160 = vmatpush.msra.mxu0 %v126
    %1161 = vmatpush.msra.mxu0 %v122
    %1162 = vmatpush.msra.mxu0 %v118
    %1163 = vmatpush.msra.mxu0 %v114
    %1164 = vmatpush.msra.mxu0 %v110
    %1165 = vmatpush.msra.mxu0 %v106
    %1166 = vmatpush.msra.mxu0 %v102
    %1167 = vmatpush.msra.mxu0 %v98
    %1168 = vmatpush.msra.mxu0 %v94
    %1169 = vmatpush.msra.mxu0 %v90
    %1170 = vmatpush.msra.mxu0 %v86
    %1171 = vmatpush.msra.mxu0 %v82
    %1172 = vmatpush.msra.mxu0 %v78
    %1173 = vmatmul.f32.gmra.mxu0 %v1101
    %v1174 = vpop.f32.mrf.mxu0
    %v1175 = vadd.f32 0.0, %v1174
    %1176 = vdwg.mxu0
    %1177 = vmatpush.msra.mxu0 %v139
    %1178 = vmatpush.msra.mxu0 %v135
    %1179 = vmatpush.msra.mxu0 %v131
    %1180 = vmatpush.msra.mxu0 %v127
    %1181 = vmatpush.msra.mxu0 %v123
    %1182 = vmatpush.msra.mxu0 %v119
    %1183 = vmatpush.msra.mxu0 %v115
    %1184 = vmatpush.msra.mxu0 %v111
    %1185 = vmatpush.msra.mxu0 %v107
    %1186 = vmatpush.msra.mxu0 %v103
    %1187 = vmatpush.msra.mxu0 %v99
    %1188 = vmatpush.msra.mxu0 %v95
    %1189 = vmatpush.msra.mxu0 %v91
    %1190 = vmatpush.msra.mxu0 %v87
    %1191 = vmatpush.msra.mxu0 %v83
    %1192 = vmatpush.msra.mxu0 %v79
    %1193 = vmatmul.f32.gmra.mxu0 %v1101
    %v1194 = vpop.f32.mrf.mxu0
    %v1195 = vadd.f32 0.0, %v1194
    %1196 = vdwg.mxu0
    %v1197 = vadd.f32 %v1113, %v1135
    %v1198 = vadd.f32 %v1114, %v1155
    %v1199 = vadd.f32 %v1115, %v1175
    %v1200 = vadd.f32 %v1116, %v1195
    %v1201 = vxor.u32 %v1197, 2147483648
    %v1202 = vxor.u32 %v1198, 2147483648
    %v1203 = vxor.u32 %v1199, 2147483648
    %v1204 = vmul.f32 %v1201, 1.442695
    %v1205 = vpow.pop %v1204
    %v1206 = vmul.f32 %v1202, 1.442695
    %v1207 = vpow.pop %v1206
    %v1208 = vmul.f32 %v1203, 1.442695
    %v1209 = vpow.pop %v1208
    %v1210 = vadd.f32 %v1205, 1.0
    %v1211 = vadd.f32 %v1207, 1.0
    %v1212 = vadd.f32 %v1209, 1.0
    %v1213 = vrcp.pop %v1210
    %v1214 = vmul.f32 %v1210, %v1213
    %v1215 = vsub.f32 1.0, %v1214
    %v1216 = vmul.f32 %v1213, %v1215
    %v1217 = vadd.f32 %v1213, %v1216
    %vm1218 = vweird.f32 %v1210
    %vm1219 = vweird.f32 %v1213
    %vm1220 = vmor %vm1218, %vm1219
    %v1221 = vsel %vm1220, %v1213, %v1217
    %v1222 = vand.u32 2147483647, %v1210
    %vm1223 = vcmp.eq.f32.partialorder %v1222, 8.507059e+37
    %v1224 = vand.u32 %v1210, 2147483648
    %v1225 = vor.u32 1.1754944e-38, %v1224
    %v1226 = vsel %vm1223, %v1225, %v1221
    %v1227 = vmul.f32 1.0, %v1226
    %v1228 = vrcp.pop %v1211
    %v1229 = vmul.f32 %v1211, %v1228
    %v1230 = vsub.f32 1.0, %v1229
    %v1231 = vmul.f32 %v1228, %v1230
    %v1232 = vadd.f32 %v1228, %v1231
    %vm1233 = vweird.f32 %v1211
    %vm1234 = vweird.f32 %v1228
    %vm1235 = vmor %vm1233, %vm1234
    %v1236 = vsel %vm1235, %v1228, %v1232
    %v1237 = vand.u32 2147483647, %v1211
    %vm1238 = vcmp.eq.f32.partialorder %v1237, 8.507059e+37
    %v1239 = vand.u32 %v1211, 2147483648
    %v1240 = vor.u32 1.1754944e-38, %v1239
    %v1241 = vsel %vm1238, %v1240, %v1236
    %v1242 = vmul.f32 1.0, %v1241
    %v1243 = vrcp.pop %v1212
    %v1244 = vmul.f32 %v1212, %v1243
    %v1245 = vsub.f32 1.0, %v1244
    %v1246 = vmul.f32 %v1243, %v1245
    %v1247 = vadd.f32 %v1243, %v1246
    %vm1248 = vweird.f32 %v1212
    %vm1249 = vweird.f32 %v1243
    %vm1250 = vmor %vm1248, %vm1249
    %v1251 = vsel %vm1250, %v1243, %v1247
    %v1252 = vand.u32 2147483647, %v1212
    %vm1253 = vcmp.eq.f32.partialorder %v1252, 8.507059e+37
    %v1254 = vand.u32 %v1212, 2147483648
    %v1255 = vor.u32 1.1754944e-38, %v1254
    %v1256 = vsel %vm1253, %v1255, %v1251
    %v1257 = vmul.f32 1.0, %v1256
    %v1258 = vtanh.pop %v1200
    %v1259 = vmul.f32 %v1242, %v1099
    %v1260 = vmul.f32 %v1227, %v1258
    %v1261 = vadd.f32 %v1259, %v1260
    %v1262 = vtanh.pop %v1261
    %v1263 = vmul.f32 %v1257, %v1262
    %s1264 = scalar_lea.vmem %s0, 14
    %v1265 = vld [vmem:[%s1264] sm:$0x3]
    %1267 = vset.pattern.permute.xlu0 0
    %1268 = vperm.xlu0 %1267, %v1265
    %v1269 = vpop.permute.xlu0 %1268
    %v1271 = vmul.f32 %v1269, %v50
    %v1272 = vmul.f32 %v1269, %v51
    %v1273 = vmul.f32 %v1269, %v52
    %v1274 = vmul.f32 %v1269, %v53
    %v1275 = vadd.f32 %v1271, %v64
    %v1276 = vadd.f32 %v1272, %v65
    %v1277 = vadd.f32 %v1273, %v66
    %v1278 = vadd.f32 %v1274, %v67
    %1279 = vmatpush.msra.mxu0 %v136
    %1280 = vmatpush.msra.mxu0 %v132
    %1281 = vmatpush.msra.mxu0 %v128
    %1282 = vmatpush.msra.mxu0 %v124
    %1283 = vmatpush.msra.mxu0 %v120
    %1284 = vmatpush.msra.mxu0 %v116
    %1285 = vmatpush.msra.mxu0 %v112
    %1286 = vmatpush.msra.mxu0 %v108
    %1287 = vmatpush.msra.mxu0 %v104
    %1288 = vmatpush.msra.mxu0 %v100
    %1289 = vmatpush.msra.mxu0 %v96
    %1290 = vmatpush.msra.mxu0 %v92
    %1291 = vmatpush.msra.mxu0 %v88
    %1292 = vmatpush.msra.mxu0 %v84
    %1293 = vmatpush.msra.mxu0 %v80
    %1294 = vmatpush.msra.mxu0 %v76
    %1295 = vmatmul.f32.gmra.mxu0 %v1263
    %v1296 = vpop.f32.mrf.mxu0
    %v1297 = vadd.f32 0.0, %v1296
    %1298 = vdwg.mxu0
    %1299 = vmatpush.msra.mxu0 %v137
    %1300 = vmatpush.msra.mxu0 %v133
    %1301 = vmatpush.msra.mxu0 %v129
    %1302 = vmatpush.msra.mxu0 %v125
    %1303 = vmatpush.msra.mxu0 %v121
    %1304 = vmatpush.msra.mxu0 %v117
    %1305 = vmatpush.msra.mxu0 %v113
    %1306 = vmatpush.msra.mxu0 %v109
    %1307 = vmatpush.msra.mxu0 %v105
    %1308 = vmatpush.msra.mxu0 %v101
    %1309 = vmatpush.msra.mxu0 %v97
    %1310 = vmatpush.msra.mxu0 %v93
    %1311 = vmatpush.msra.mxu0 %v89
    %1312 = vmatpush.msra.mxu0 %v85
    %1313 = vmatpush.msra.mxu0 %v81
    %1314 = vmatpush.msra.mxu0 %v77
    %1315 = vmatmul.f32.gmra.mxu0 %v1263
    %v1316 = vpop.f32.mrf.mxu0
    %v1317 = vadd.f32 0.0, %v1316
    %1318 = vdwg.mxu0
    %1319 = vmatpush.msra.mxu0 %v138
    %1320 = vmatpush.msra.mxu0 %v134
    %1321 = vmatpush.msra.mxu0 %v130
    %1322 = vmatpush.msra.mxu0 %v126
    %1323 = vmatpush.msra.mxu0 %v122
    %1324 = vmatpush.msra.mxu0 %v118
    %1325 = vmatpush.msra.mxu0 %v114
    %1326 = vmatpush.msra.mxu0 %v110
    %1327 = vmatpush.msra.mxu0 %v106
    %1328 = vmatpush.msra.mxu0 %v102
    %1329 = vmatpush.msra.mxu0 %v98
    %1330 = vmatpush.msra.mxu0 %v94
    %1331 = vmatpush.msra.mxu0 %v90
    %1332 = vmatpush.msra.mxu0 %v86
    %1333 = vmatpush.msra.mxu0 %v82
    %1334 = vmatpush.msra.mxu0 %v78
    %1335 = vmatmul.f32.gmra.mxu0 %v1263
    %v1336 = vpop.f32.mrf.mxu0
    %v1337 = vadd.f32 0.0, %v1336
    %1338 = vdwg.mxu0
    %1339 = vmatpush.msra.mxu0 %v139
    %1340 = vmatpush.msra.mxu0 %v135
    %1341 = vmatpush.msra.mxu0 %v131
    %1342 = vmatpush.msra.mxu0 %v127
    %1343 = vmatpush.msra.mxu0 %v123
    %1344 = vmatpush.msra.mxu0 %v119
    %1345 = vmatpush.msra.mxu0 %v115
    %1346 = vmatpush.msra.mxu0 %v111
    %1347 = vmatpush.msra.mxu0 %v107
    %1348 = vmatpush.msra.mxu0 %v103
    %1349 = vmatpush.msra.mxu0 %v99
    %1350 = vmatpush.msra.mxu0 %v95
    %1351 = vmatpush.msra.mxu0 %v91
    %1352 = vmatpush.msra.mxu0 %v87
    %1353 = vmatpush.msra.mxu0 %v83
    %1354 = vmatpush.msra.mxu0 %v79
    %1355 = vmatmul.f32.gmra.mxu0 %v1263
    %v1356 = vpop.f32.mrf.mxu0
    %v1357 = vadd.f32 0.0, %v1356
    %1358 = vdwg.mxu0
    %v1359 = vadd.f32 %v1275, %v1297
    %v1360 = vadd.f32 %v1276, %v1317
    %v1361 = vadd.f32 %v1277, %v1337
    %v1362 = vadd.f32 %v1278, %v1357
    %v1363 = vxor.u32 %v1359, 2147483648
    %v1364 = vxor.u32 %v1360, 2147483648
    %v1365 = vxor.u32 %v1361, 2147483648
    %v1366 = vmul.f32 %v1363, 1.442695
    %v1367 = vpow.pop %v1366
    %v1368 = vmul.f32 %v1364, 1.442695
    %v1369 = vpow.pop %v1368
    %v1370 = vmul.f32 %v1365, 1.442695
    %v1371 = vpow.pop %v1370
    %v1372 = vadd.f32 %v1367, 1.0
    %v1373 = vadd.f32 %v1369, 1.0
    %v1374 = vadd.f32 %v1371, 1.0
    %v1375 = vrcp.pop %v1372
    %v1376 = vmul.f32 %v1372, %v1375
    %v1377 = vsub.f32 1.0, %v1376
    %v1378 = vmul.f32 %v1375, %v1377
    %v1379 = vadd.f32 %v1375, %v1378
    %vm1380 = vweird.f32 %v1372
    %vm1381 = vweird.f32 %v1375
    %vm1382 = vmor %vm1380, %vm1381
    %v1383 = vsel %vm1382, %v1375, %v1379
    %v1384 = vand.u32 2147483647, %v1372
    %vm1385 = vcmp.eq.f32.partialorder %v1384, 8.507059e+37
    %v1386 = vand.u32 %v1372, 2147483648
    %v1387 = vor.u32 1.1754944e-38, %v1386
    %v1388 = vsel %vm1385, %v1387, %v1383
    %v1389 = vmul.f32 1.0, %v1388
    %v1390 = vrcp.pop %v1373
    %v1391 = vmul.f32 %v1373, %v1390
    %v1392 = vsub.f32 1.0, %v1391
    %v1393 = vmul.f32 %v1390, %v1392
    %v1394 = vadd.f32 %v1390, %v1393
    %vm1395 = vweird.f32 %v1373
    %vm1396 = vweird.f32 %v1390
    %vm1397 = vmor %vm1395, %vm1396
    %v1398 = vsel %vm1397, %v1390, %v1394
    %v1399 = vand.u32 2147483647, %v1373
    %vm1400 = vcmp.eq.f32.partialorder %v1399, 8.507059e+37
    %v1401 = vand.u32 %v1373, 2147483648
    %v1402 = vor.u32 1.1754944e-38, %v1401
    %v1403 = vsel %vm1400, %v1402, %v1398
    %v1404 = vmul.f32 1.0, %v1403
    %v1405 = vrcp.pop %v1374
    %v1406 = vmul.f32 %v1374, %v1405
    %v1407 = vsub.f32 1.0, %v1406
    %v1408 = vmul.f32 %v1405, %v1407
    %v1409 = vadd.f32 %v1405, %v1408
    %vm1410 = vweird.f32 %v1374
    %vm1411 = vweird.f32 %v1405
    %vm1412 = vmor %vm1410, %vm1411
    %v1413 = vsel %vm1412, %v1405, %v1409
    %v1414 = vand.u32 2147483647, %v1374
    %vm1415 = vcmp.eq.f32.partialorder %v1414, 8.507059e+37
    %v1416 = vand.u32 %v1374, 2147483648
    %v1417 = vor.u32 1.1754944e-38, %v1416
    %v1418 = vsel %vm1415, %v1417, %v1413
    %v1419 = vmul.f32 1.0, %v1418
    %v1420 = vtanh.pop %v1362
    %v1421 = vmul.f32 %v1404, %v1261
    %v1422 = vmul.f32 %v1389, %v1420
    %v1423 = vadd.f32 %v1421, %v1422
    %v1424 = vtanh.pop %v1423
    %v1425 = vmul.f32 %v1419, %v1424
    %s1426 = scalar_lea.vmem %s0, 16
    %v1427 = vld [vmem:[%s1426] sm:$0x3]
    %1429 = vset.pattern.permute.xlu0 0
    %1430 = vperm.xlu0 %1429, %v1427
    %v1431 = vpop.permute.xlu0 %1430
    %v1433 = vmul.f32 %v1431, %v50
    %v1434 = vmul.f32 %v1431, %v51
    %v1435 = vmul.f32 %v1431, %v52
    %v1436 = vmul.f32 %v1431, %v53
    %v1437 = vadd.f32 %v1433, %v64
    %v1438 = vadd.f32 %v1434, %v65
    %v1439 = vadd.f32 %v1435, %v66
    %v1440 = vadd.f32 %v1436, %v67
    %1441 = vmatpush.msra.mxu0 %v136
    %1442 = vmatpush.msra.mxu0 %v132
    %1443 = vmatpush.msra.mxu0 %v128
    %1444 = vmatpush.msra.mxu0 %v124
    %1445 = vmatpush.msra.mxu0 %v120
    %1446 = vmatpush.msra.mxu0 %v116
    %1447 = vmatpush.msra.mxu0 %v112
    %1448 = vmatpush.msra.mxu0 %v108
    %1449 = vmatpush.msra.mxu0 %v104
    %1450 = vmatpush.msra.mxu0 %v100
    %1451 = vmatpush.msra.mxu0 %v96
    %1452 = vmatpush.msra.mxu0 %v92
    %1453 = vmatpush.msra.mxu0 %v88
    %1454 = vmatpush.msra.mxu0 %v84
    %1455 = vmatpush.msra.mxu0 %v80
    %1456 = vmatpush.msra.mxu0 %v76
    %1457 = vmatmul.f32.gmra.mxu0 %v1425
    %v1458 = vpop.f32.mrf.mxu0
    %v1459 = vadd.f32 0.0, %v1458
    %1460 = vdwg.mxu0
    %1461 = vmatpush.msra.mxu0 %v137
    %1462 = vmatpush.msra.mxu0 %v133
    %1463 = vmatpush.msra.mxu0 %v129
    %1464 = vmatpush.msra.mxu0 %v125
    %1465 = vmatpush.msra.mxu0 %v121
    %1466 = vmatpush.msra.mxu0 %v117
    %1467 = vmatpush.msra.mxu0 %v113
    %1468 = vmatpush.msra.mxu0 %v109
    %1469 = vmatpush.msra.mxu0 %v105
    %1470 = vmatpush.msra.mxu0 %v101
    %1471 = vmatpush.msra.mxu0 %v97
    %1472 = vmatpush.msra.mxu0 %v93
    %1473 = vmatpush.msra.mxu0 %v89
    %1474 = vmatpush.msra.mxu0 %v85
    %1475 = vmatpush.msra.mxu0 %v81
    %1476 = vmatpush.msra.mxu0 %v77
    %1477 = vmatmul.f32.gmra.mxu0 %v1425
    %v1478 = vpop.f32.mrf.mxu0
    %v1479 = vadd.f32 0.0, %v1478
    %1480 = vdwg.mxu0
    %1481 = vmatpush.msra.mxu0 %v138
    %1482 = vmatpush.msra.mxu0 %v134
    %1483 = vmatpush.msra.mxu0 %v130
    %1484 = vmatpush.msra.mxu0 %v126
    %1485 = vmatpush.msra.mxu0 %v122
    %1486 = vmatpush.msra.mxu0 %v118
    %1487 = vmatpush.msra.mxu0 %v114
    %1488 = vmatpush.msra.mxu0 %v110
    %1489 = vmatpush.msra.mxu0 %v106
    %1490 = vmatpush.msra.mxu0 %v102
    %1491 = vmatpush.msra.mxu0 %v98
    %1492 = vmatpush.msra.mxu0 %v94
    %1493 = vmatpush.msra.mxu0 %v90
    %1494 = vmatpush.msra.mxu0 %v86
    %1495 = vmatpush.msra.mxu0 %v82
    %1496 = vmatpush.msra.mxu0 %v78
    %1497 = vmatmul.f32.gmra.mxu0 %v1425
    %v1498 = vpop.f32.mrf.mxu0
    %v1499 = vadd.f32 0.0, %v1498
    %1500 = vdwg.mxu0
    %1501 = vmatpush.msra.mxu0 %v139
    %1502 = vmatpush.msra.mxu0 %v135
    %1503 = vmatpush.msra.mxu0 %v131
    %1504 = vmatpush.msra.mxu0 %v127
    %1505 = vmatpush.msra.mxu0 %v123
    %1506 = vmatpush.msra.mxu0 %v119
    %1507 = vmatpush.msra.mxu0 %v115
    %1508 = vmatpush.msra.mxu0 %v111
    %1509 = vmatpush.msra.mxu0 %v107
    %1510 = vmatpush.msra.mxu0 %v103
    %1511 = vmatpush.msra.mxu0 %v99
    %1512 = vmatpush.msra.mxu0 %v95
    %1513 = vmatpush.msra.mxu0 %v91
    %1514 = vmatpush.msra.mxu0 %v87
    %1515 = vmatpush.msra.mxu0 %v83
    %1516 = vmatpush.msra.mxu0 %v79
    %1517 = vmatmul.f32.gmra.mxu0 %v1425
    %v1518 = vpop.f32.mrf.mxu0
    %v1519 = vadd.f32 0.0, %v1518
    %1520 = vdwg.mxu0
    %v1521 = vadd.f32 %v1437, %v1459
    %v1522 = vadd.f32 %v1438, %v1479
    %v1523 = vadd.f32 %v1439, %v1499
    %v1524 = vadd.f32 %v1440, %v1519
    %v1525 = vxor.u32 %v1521, 2147483648
    %v1526 = vxor.u32 %v1522, 2147483648
    %v1527 = vxor.u32 %v1523, 2147483648
    %v1528 = vmul.f32 %v1525, 1.442695
    %v1529 = vpow.pop %v1528
    %v1530 = vmul.f32 %v1526, 1.442695
    %v1531 = vpow.pop %v1530
    %v1532 = vmul.f32 %v1527, 1.442695
    %v1533 = vpow.pop %v1532
    %v1534 = vadd.f32 %v1529, 1.0
    %v1535 = vadd.f32 %v1531, 1.0
    %v1536 = vadd.f32 %v1533, 1.0
    %v1537 = vrcp.pop %v1534
    %v1538 = vmul.f32 %v1534, %v1537
    %v1539 = vsub.f32 1.0, %v1538
    %v1540 = vmul.f32 %v1537, %v1539
    %v1541 = vadd.f32 %v1537, %v1540
    %vm1542 = vweird.f32 %v1534
    %vm1543 = vweird.f32 %v1537
    %vm1544 = vmor %vm1542, %vm1543
    %v1545 = vsel %vm1544, %v1537, %v1541
    %v1546 = vand.u32 2147483647, %v1534
    %vm1547 = vcmp.eq.f32.partialorder %v1546, 8.507059e+37
    %v1548 = vand.u32 %v1534, 2147483648
    %v1549 = vor.u32 1.1754944e-38, %v1548
    %v1550 = vsel %vm1547, %v1549, %v1545
    %v1551 = vmul.f32 1.0, %v1550
    %v1552 = vrcp.pop %v1535
    %v1553 = vmul.f32 %v1535, %v1552
    %v1554 = vsub.f32 1.0, %v1553
    %v1555 = vmul.f32 %v1552, %v1554
    %v1556 = vadd.f32 %v1552, %v1555
    %vm1557 = vweird.f32 %v1535
    %vm1558 = vweird.f32 %v1552
    %vm1559 = vmor %vm1557, %vm1558
    %v1560 = vsel %vm1559, %v1552, %v1556
    %v1561 = vand.u32 2147483647, %v1535
    %vm1562 = vcmp.eq.f32.partialorder %v1561, 8.507059e+37
    %v1563 = vand.u32 %v1535, 2147483648
    %v1564 = vor.u32 1.1754944e-38, %v1563
    %v1565 = vsel %vm1562, %v1564, %v1560
    %v1566 = vmul.f32 1.0, %v1565
    %v1567 = vrcp.pop %v1536
    %v1568 = vmul.f32 %v1536, %v1567
    %v1569 = vsub.f32 1.0, %v1568
    %v1570 = vmul.f32 %v1567, %v1569
    %v1571 = vadd.f32 %v1567, %v1570
    %vm1572 = vweird.f32 %v1536
    %vm1573 = vweird.f32 %v1567
    %vm1574 = vmor %vm1572, %vm1573
    %v1575 = vsel %vm1574, %v1567, %v1571
    %v1576 = vand.u32 2147483647, %v1536
    %vm1577 = vcmp.eq.f32.partialorder %v1576, 8.507059e+37
    %v1578 = vand.u32 %v1536, 2147483648
    %v1579 = vor.u32 1.1754944e-38, %v1578
    %v1580 = vsel %vm1577, %v1579, %v1575
    %v1581 = vmul.f32 1.0, %v1580
    %v1582 = vtanh.pop %v1524
    %v1583 = vmul.f32 %v1566, %v1423
    %v1584 = vmul.f32 %v1551, %v1582
    %v1585 = vadd.f32 %v1583, %v1584
    %v1586 = vtanh.pop %v1585
    %v1587 = vmul.f32 %v1581, %v1586
    %v1588 = vld [vmem:[%s4] sm:$0x1]
    %v1590 = vperm.slane %v1588, 0
    %1591 = vrot.lane.b32.xlu0 %v1590, 64
    %v1592 = vpop.permute.xlu0 %1591
    %v1594 = vmul.f32 %v1587, %v1592
    %1596 = vrot.lane.b32.xlu0 %v1594, 64
    %v1597 = vpop.permute.xlu0 %1596
    %vm1599 = vcmask 517120
    %v1600 = vsel %vm1599, %v1597, 0.0
    %1601 = vadd.xlane.f32.xlu0 %v1600
    %v1602 = vpop.xlane.xlu0 %1601
    %v1603 = vld [vmem:[#allocation2] sm:$0x1]
    %v1605 = vperm.slane %v1603, 0
    %v1607 = vadd.f32 %v1602, %v1605
    %1609 = vset.pattern.permute.xlu0 0
    %1610 = vperm.xlu0 %1609, %v1607
    %v1611 = vpop.permute.xlu0 %1610
    %1613 = vst [vmem:[#allocation6] sm:$0x3] %v1611
    // Predicated region
    $region30: #{tpu_custom_call.1} parent=1 // pred_check
      _
    $region31: #{tpu_custom_call.1} parent=1 // pred_check_branch
      %1615 = sbr.rel (0) target = $region33
    $region32: #{tpu_custom_call.1} parent=1 // pred_region
      %1617 = vsyncadd [#allocation5], 0
      %s1619 = sshll.u32 [#allocation6], 4
      %s1620 = int_to_ptr.vmem [resolvable:$true] %s1619
      %s1621 = sshll.u32 %s6, 4
      %s1622 = int_to_ptr.hbm [resolvable:$true] %s1621
      %1624 = dma.vmem_to_hbm [thread:$0]  %s1620, 32, %s1622, [#allocation5]
    $region33: #{tpu_custom_call.1} parent=1 // pred_fallthru
      _
    // Predicated region
    $region34: #{tpu_custom_call.1} parent=1 // pred_check
      _
    $region35: #{tpu_custom_call.1} parent=1 // pred_check_branch
      %1626 = sbr.rel (0) target = $region37
    $region36: #{tpu_custom_call.1} parent=1 // pred_region
      %1628 = dma.done [#allocation5], 32
    $region37: #{tpu_custom_call.1} parent=1 // pred_fallthru
      _
    %1629 = vsyncpa [#allocation4], 1
    %1630 = vsyncpa [#allocation5], 1

</llo_original>
